<compile_context>
chip_gen: v7x
topology: tpu7x:2x2x1
jax: 0.10.0
libtpu: 0.0.40
codegen_flags: <defaults>
</compile_context>

<pallas_src>
import functools

import jax
import jax.numpy as jnp
from jax import lax
from jax.experimental import pallas as pl
from jax.experimental.pallas import tpu as pltpu


# ----------------------------------------------------------------------------
# Pallas kernel: one grid step == Bt batch elements, both branches fused.
# All activations are (C, HW): channels on sublanes, flattened spatial on lanes.
# ----------------------------------------------------------------------------
def _cas_kernel(xa_ref, xb_ref, masks_ref, wstk_ref, bstk_ref,
                wfc1_ref, bfc1_ref, wfc2_ref, bfc2_ref,
                oa_ref, ob_ref, tap_ref, *, W, C, Bt):
    HW = masks_ref.shape[1]
    # Tap order matches the wrapper's weight stacking: dy, dx in (-1,0,1)^2.
    shifts = [dy * W + dx for dy in (-1, 0, 1) for dx in (-1, 0, 1)]
    masks = masks_ref[...]                                     # (9, HW), loaded once

    def gate_logits(x, s):
        # GAP -> FC -> ReLU -> FC, all as tiny column vectors (C,1)/(Cr,1).
        v = jnp.mean(x, axis=1, keepdims=True)                 # (C, 1)
        h = jnp.dot(wfc1_ref[s], v,
                    preferred_element_type=jnp.float32) + bfc1_ref[s]
        h = jnp.maximum(h, 0.0)
        return jnp.dot(wfc2_ref[s], h,
                       preferred_element_type=jnp.float32) + bfc2_ref[s]  # (C, 1)

    def branch_out(x_self, x_other, s, A):
        # Stack the 9 rolled + boundary-masked conv taps of x_self plus the raw
        # cross-branch input (folded feature_sh∘syn 1x1) into a (10*C, HW) slab,
        # then contract once on the MXU: (C, 10C) @ (10C, HW).
        for k, shift in enumerate(shifts):
            if shift == 0:
                shifted = x_self
            else:
                shifted = pltpu.roll(x_self, shift=(-shift) % HW, axis=1)
            tap_ref[k * C:(k + 1) * C, :] = shifted * masks[k:k + 1, :]
        tap_ref[9 * C:10 * C, :] = x_other
        y = jnp.dot(wstk_ref[s], tap_ref[...],
                    preferred_element_type=jnp.float32) + bstk_ref[s]
        return (x_self + y) * A                                # residual + gate

    for b in range(Bt):                                        # Bt small & static
        xa = xa_ref[b]                                         # (C, HW)
        xb = xb_ref[b]
        # Small channel-descriptor path first (keeps big live ranges short).
        A = jax.nn.sigmoid(gate_logits(xa, 0) + gate_logits(xb, 1))  # (C,1); A_a==A_b
        oa_ref[b] = branch_out(xa, xb, 0, A).astype(oa_ref.dtype)
        ob_ref[b] = branch_out(xb, xa, 1, A).astype(ob_ref.dtype)


# ----------------------------------------------------------------------------
# Wrapper: free reshape to (B, C, H*W), weight folding/stacking, pallas_call.
# ----------------------------------------------------------------------------
def cas_forward(x_a_nchw, x_b_nchw, params):
    B, C, H, W = x_a_nchw.shape
    HW = H * W

    # Lane-dense channel-major layout: (B, C, H*W). Trailing-dim merge is free;
    # no NCHW<->NHWC transposes, no spatial pads (halo handled via roll+mask).
    xa = x_a_nchw.reshape(B, C, HW).astype(jnp.float32)
    xb = x_b_nchw.reshape(B, C, HW).astype(jnp.float32)

    # Hoisted boundary-validity masks for the 9 conv taps: (9, HW) float32.
    flat = jnp.arange(HW, dtype=jnp.int32)
    row, col = flat // W, flat % W
    masks = jnp.stack([
        ((row + dy >= 0) & (row + dy < H) & (col + dx >= 0) & (col + dx < W))
        .astype(jnp.float32)
        for dy in (-1, 0, 1) for dx in (-1, 0, 1)])            # (9, HW)

    # Fold feature_sh (per-branch 1x1) into the cross-branch syn 1x1:
    #   syn_a = Wsyn_a @ (Wsh_b @ x_b + bsh_b) + bsyn_a = wcs_a @ x_b + bcs_a
    wsh, bsh = params['wsh'], params['bsh']
    wsyn, bsyn = params['wsyn'], params['bsyn']
    wcs = jnp.stack([wsyn[0] @ wsh[1], wsyn[1] @ wsh[0]])                      # (2, C, C)
    bcs = jnp.stack([wsyn[0] @ bsh[1] + bsyn[0], wsyn[1] @ bsh[0] + bsyn[1]])  # (2, C, 1)

    # Stack 9 conv taps + syn along the contraction dim: (2, C, 10*C).
    wt = params['wt']                                          # (2, 3, 3, C, C)
    wt_flat = jnp.concatenate(
        [wt[:, kh, kw] for kh in range(3) for kw in range(3)], axis=2)  # (2, C, 9C)
    wstk = jnp.concatenate([wt_flat, wcs], axis=2)             # (2, C, 10C)
    bstk = params['bt'] + bcs                                  # (2, C, 1)

    # Block more work per grid step: Bt batch elements per block, input block
    # capped at ~1 MiB (v7x-safe; double on v5e/v6e would also be fine).
    bytes_per_img = C * HW * 4
    budget = 1 << 20
    Bt = 1
    for cand in range(1, B + 1):
        if B % cand == 0 and cand * bytes_per_img <= budget:
            Bt = cand
    grid = (B // Bt,)

    x_spec = pl.BlockSpec((Bt, C, HW), lambda i: (i, 0, 0))

    def const_spec(arr):
        # Whole array, constant across the grid -> single-buffer it.
        zeros = (0,) * arr.ndim
        return pl.BlockSpec(arr.shape, lambda i, _z=zeros: _z,
                            pipeline_mode=pl.Buffered(1))

    consts = (masks, wstk, bstk,
              params['wfc1'], params['bfc1'], params['wfc2'], params['bfc2'])

    # Derive the VMEM limit from actual block sizes (never the full 64 MiB of v7x).
    blk_bytes = Bt * C * HW * 4
    const_bytes = sum(int(c.size) * 4 for c in consts)
    scratch_bytes = 10 * C * HW * 4
    needed = 4 * blk_bytes * 2 + const_bytes + scratch_bytes   # in/out double-buffered
    vmem_limit = int(min(max(2 * needed, 16 << 20), 48 << 20))

    kernel = functools.partial(_cas_kernel, W=W, C=C, Bt=Bt)
    oa, ob = pl.pallas_call(
        kernel,
        grid=grid,
        in_specs=[x_spec, x_spec] + [const_spec(c) for c in consts],
        out_specs=[x_spec, x_spec],
        out_shape=[jax.ShapeDtypeStruct((B, C, HW), jnp.float32),
                   jax.ShapeDtypeStruct((B, C, HW), jnp.float32)],
        scratch_shapes=[pltpu.VMEM((10 * C, HW), jnp.float32)],
        compiler_params=pltpu.CompilerParams(
            dimension_semantics=("parallel",),
            vmem_limit_bytes=vmem_limit),
    )(xa, xb, *consts)

    return oa.reshape(B, C, H, W), ob.reshape(B, C, H, W)


# ----------------------------------------------------------------------------
# Deterministic parameter init (branches stacked on leading dim: 0=a, 1=b).
# Weight orientation is kernel-friendly: (out_channels, in_channels).
# ----------------------------------------------------------------------------
def init_params(key, C, ratio):
    Cr = max(C // ratio, 1)
    keys = jax.random.split(key, 10)

    def nrm(k, shape, scale=0.1):
        return (scale * jax.random.normal(k, shape)).astype(jnp.float32)

    return dict(
        wt=nrm(keys[0], (2, 3, 3, C, C)),   # (branch, kh, kw, c_out, c_in)
        bt=nrm(keys[1], (2, C, 1)),
        wsh=nrm(keys[2], (2, C, C)),        # (branch, c_out, c_in)
        bsh=nrm(keys[3], (2, C, 1)),
        wfc1=nrm(keys[4], (2, Cr, C)),
        bfc1=nrm(keys[5], (2, Cr, 1)),
        wfc2=nrm(keys[6], (2, C, Cr)),
        bfc2=nrm(keys[7], (2, C, 1)),
        wsyn=nrm(keys[8], (2, C, C)),
        bsyn=nrm(keys[9], (2, C, 1)),
    )


# ----------------------------------------------------------------------------
# Pure-JAX reference (NCHW in / NCHW out), un-folded weights.
# ----------------------------------------------------------------------------
def ref_forward_nchw(x_a, x_b, params):
    def b4(v):                       # (C,1) -> (1,C,1,1)
        return v.reshape(1, -1, 1, 1)

    def pre(x, s):
        w_oihw = jnp.transpose(params['wt'][s], (2, 3, 0, 1))   # (co, ci, kh, kw)
        t = lax.conv_general_dilated(
            x, w_oihw, (1, 1), 'SAME',
            dimension_numbers=('NCHW', 'OIHW', 'NCHW')) + b4(params['bt'][s])
        sh = jnp.einsum('oc,bchw->bohw', params['wsh'][s], x) + b4(params['bsh'][s])
        v = jnp.mean(x, axis=(2, 3))                            # (B, C)
        h = jnp.maximum(v @ params['wfc1'][s].T + params['bfc1'][s][:, 0], 0.0)
        V = h @ params['wfc2'][s].T + params['bfc2'][s][:, 0]   # (B, C)
        return t, V, sh

    ta, Va, sha = pre(x_a, 0)
    tb, Vb, shb = pre(x_b, 1)
    A = jax.nn.sigmoid(Va + Vb)[:, :, None, None]
    syn_a = jnp.einsum('oc,bchw->bohw', params['wsyn'][0], shb) + b4(params['bsyn'][0])
    syn_b = jnp.einsum('oc,bchw->bohw', params['wsyn'][1], sha) + b4(params['bsyn'][1])
    return (x_a + ta + syn_a) * A, (x_b + tb + syn_b) * A


if __name__ == "__main__":
    B, C, H, W, ratio = 2, 8, 16, 16, 2

    key = jax.random.PRNGKey(0)
    kx, kp = jax.random.split(key)
    kxa, kxb = jax.random.split(kx)
    x_a = jax.random.normal(kxa, (B, C, H, W), jnp.float32)
    x_b = jax.random.normal(kxb, (B, C, H, W), jnp.float32)
    params = init_params(kp, C, ratio)

    fwd = jax.jit(cas_forward)
    out_a, out_b = fwd(x_a, x_b, params)
    jax.block_until_ready((out_a, out_b))

    ref_a, ref_b = ref_forward_nchw(x_a, x_b, params)
    assert out_a.shape == (B, C, H, W) and out_b.shape == (B, C, H, W)
    assert jnp.allclose(out_a, ref_a, atol=2e-3, rtol=2e-3), \
        float(jnp.max(jnp.abs(out_a - ref_a)))
    assert jnp.allclose(out_b, ref_b, atol=2e-3, rtol=2e-3), \
        float(jnp.max(jnp.abs(out_b - ref_b)))

    print("KERNEL_OK")
</pallas_src>

<mosaic_0001>
module attributes {stable_mosaic.version = 11 : i64} {
  func.func @_cas_kernel(%arg0: i32, %arg1: memref<2x8x256xf32, #tpu.memory_space<vmem>>, %arg2: memref<2x8x256xf32, #tpu.memory_space<vmem>>, %arg3: memref<9x256xf32, #tpu.memory_space<vmem>>, %arg4: memref<2x8x80xf32, #tpu.memory_space<vmem>>, %arg5: memref<2x8x1xf32, #tpu.memory_space<vmem>>, %arg6: memref<2x4x8xf32, #tpu.memory_space<vmem>>, %arg7: memref<2x4x1xf32, #tpu.memory_space<vmem>>, %arg8: memref<2x8x4xf32, #tpu.memory_space<vmem>>, %arg9: memref<2x8x1xf32, #tpu.memory_space<vmem>>, %arg10: memref<2x8x256xf32, #tpu.memory_space<vmem>>, %arg11: memref<2x8x256xf32, #tpu.memory_space<vmem>>, %arg12: memref<80x256xf32, #tpu.memory_space<vmem>>) attributes {dimension_semantics = [#tpu.dimension_semantics<parallel>], iteration_bounds = array<i64: 1>, scalar_prefetch = 0 : i64, scratch_operands = 1 : i64, tpu.core_type = #tpu.core_type<tc>, window_params = [{transform_indices = @transform_0, window_bounds = array<i64: 2, 8, 256>}, {transform_indices = @transform_1, window_bounds = array<i64: 2, 8, 256>}, {pipeline_mode = #tpu.pipeline_mode<synchronous>, transform_indices = @transform_2, window_bounds = array<i64: 9, 256>}, {pipeline_mode = #tpu.pipeline_mode<synchronous>, transform_indices = @transform_3, window_bounds = array<i64: 2, 8, 80>}, {pipeline_mode = #tpu.pipeline_mode<synchronous>, transform_indices = @transform_4, window_bounds = array<i64: 2, 8, 1>}, {pipeline_mode = #tpu.pipeline_mode<synchronous>, transform_indices = @transform_5, window_bounds = array<i64: 2, 4, 8>}, {pipeline_mode = #tpu.pipeline_mode<synchronous>, transform_indices = @transform_6, window_bounds = array<i64: 2, 4, 1>}, {pipeline_mode = #tpu.pipeline_mode<synchronous>, transform_indices = @transform_7, window_bounds = array<i64: 2, 8, 4>}, {pipeline_mode = #tpu.pipeline_mode<synchronous>, transform_indices = @transform_8, window_bounds = array<i64: 2, 8, 1>}, {transform_indices = @transform_9, window_bounds = array<i64: 2, 8, 256>}, {transform_indices = @transform_10, window_bounds = array<i64: 2, 8, 256>}]} {
    %c0 = arith.constant 0 : index
    %c0_0 = arith.constant 0 : index
    %0 = vector.load %arg3[%c0, %c0_0] : memref<9x256xf32, #tpu.memory_space<vmem>>, vector<9x256xf32>
    %c0_1 = arith.constant 0 : index
    %c0_2 = arith.constant 0 : index
    %c0_3 = arith.constant 0 : index
    %1 = vector.load %arg1[%c0_1, %c0_2, %c0_3] : memref<2x8x256xf32, #tpu.memory_space<vmem>>, vector<1x8x256xf32>
    %2 = vector.shape_cast %1 : vector<1x8x256xf32> to vector<8x256xf32>
    %c0_4 = arith.constant 0 : index
    %c0_5 = arith.constant 0 : index
    %c0_6 = arith.constant 0 : index
    %3 = vector.load %arg2[%c0_4, %c0_5, %c0_6] : memref<2x8x256xf32, #tpu.memory_space<vmem>>, vector<1x8x256xf32>
    %4 = vector.shape_cast %3 : vector<1x8x256xf32> to vector<8x256xf32>
    %cst = arith.constant dense<0.000000e+00> : vector<8xf32>
    %5 = vector.multi_reduction <add>, %2, %cst [1] : vector<8x256xf32> to vector<8xf32>
    %6 = vector.shape_cast %5 : vector<8xf32> to vector<8x1xf32>
    %cst_7 = arith.constant 2.560000e+02 : f32
    %7 = vector.broadcast %cst_7 : f32 to vector<8x1xf32>
    %8 = arith.divf %6, %7 : vector<8x1xf32>
    %c0_8 = arith.constant 0 : index
    %c0_9 = arith.constant 0 : index
    %c0_10 = arith.constant 0 : index
    %9 = vector.load %arg6[%c0_8, %c0_9, %c0_10] : memref<2x4x8xf32, #tpu.memory_space<vmem>>, vector<1x4x8xf32>
    %10 = vector.shape_cast %9 : vector<1x4x8xf32> to vector<4x8xf32>
    %cst_11 = arith.constant dense<0.000000e+00> : vector<4x1xf32>
    %11 = tpu.matmul %10, %8, %cst_11 {dimension_numbers = #tpu.dot_dimension_numbers<[1], [0], [0], [1], [0, 0, 1, 1], [], []>} : vector<4x8xf32>, vector<8x1xf32>, vector<4x1xf32> -> vector<4x1xf32>
    %c0_12 = arith.constant 0 : index
    %c0_13 = arith.constant 0 : index
    %c0_14 = arith.constant 0 : index
    %12 = vector.load %arg7[%c0_12, %c0_13, %c0_14] : memref<2x4x1xf32, #tpu.memory_space<vmem>>, vector<1x4x1xf32>
    %13 = vector.shape_cast %12 : vector<1x4x1xf32> to vector<4x1xf32>
    %14 = arith.addf %11, %13 : vector<4x1xf32>
    %cst_15 = arith.constant 0.000000e+00 : f32
    %15 = vector.broadcast %cst_15 : f32 to vector<4x1xf32>
    %16 = arith.maximumf %14, %15 : vector<4x1xf32>
    %c0_16 = arith.constant 0 : index
    %c0_17 = arith.constant 0 : index
    %c0_18 = arith.constant 0 : index
    %17 = vector.load %arg8[%c0_16, %c0_17, %c0_18] : memref<2x8x4xf32, #tpu.memory_space<vmem>>, vector<1x8x4xf32>
    %18 = vector.shape_cast %17 : vector<1x8x4xf32> to vector<8x4xf32>
    %cst_19 = arith.constant dense<0.000000e+00> : vector<8x1xf32>
    %19 = tpu.matmul %18, %16, %cst_19 {dimension_numbers = #tpu.dot_dimension_numbers<[1], [0], [0], [1], [0, 0, 1, 1], [], []>} : vector<8x4xf32>, vector<4x1xf32>, vector<8x1xf32> -> vector<8x1xf32>
    %c0_20 = arith.constant 0 : index
    %c0_21 = arith.constant 0 : index
    %c0_22 = arith.constant 0 : index
    %20 = vector.load %arg9[%c0_20, %c0_21, %c0_22] : memref<2x8x1xf32, #tpu.memory_space<vmem>>, vector<1x8x1xf32>
    %21 = vector.shape_cast %20 : vector<1x8x1xf32> to vector<8x1xf32>
    %22 = arith.addf %19, %21 : vector<8x1xf32>
    %cst_23 = arith.constant dense<0.000000e+00> : vector<8xf32>
    %23 = vector.multi_reduction <add>, %4, %cst_23 [1] : vector<8x256xf32> to vector<8xf32>
    %24 = vector.shape_cast %23 : vector<8xf32> to vector<8x1xf32>
    %cst_24 = arith.constant 2.560000e+02 : f32
    %25 = vector.broadcast %cst_24 : f32 to vector<8x1xf32>
    %26 = arith.divf %24, %25 : vector<8x1xf32>
    %c1 = arith.constant 1 : index
    %c0_25 = arith.constant 0 : index
    %c0_26 = arith.constant 0 : index
    %27 = vector.load %arg6[%c1, %c0_25, %c0_26] : memref<2x4x8xf32, #tpu.memory_space<vmem>>, vector<1x4x8xf32>
    %28 = vector.shape_cast %27 : vector<1x4x8xf32> to vector<4x8xf32>
    %cst_27 = arith.constant dense<0.000000e+00> : vector<4x1xf32>
    %29 = tpu.matmul %28, %26, %cst_27 {dimension_numbers = #tpu.dot_dimension_numbers<[1], [0], [0], [1], [0, 0, 1, 1], [], []>} : vector<4x8xf32>, vector<8x1xf32>, vector<4x1xf32> -> vector<4x1xf32>
    %c1_28 = arith.constant 1 : index
    %c0_29 = arith.constant 0 : index
    %c0_30 = arith.constant 0 : index
    %30 = vector.load %arg7[%c1_28, %c0_29, %c0_30] : memref<2x4x1xf32, #tpu.memory_space<vmem>>, vector<1x4x1xf32>
    %31 = vector.shape_cast %30 : vector<1x4x1xf32> to vector<4x1xf32>
    %32 = arith.addf %29, %31 : vector<4x1xf32>
    %cst_31 = arith.constant 0.000000e+00 : f32
    %33 = vector.broadcast %cst_31 : f32 to vector<4x1xf32>
    %34 = arith.maximumf %32, %33 : vector<4x1xf32>
    %c1_32 = arith.constant 1 : index
    %c0_33 = arith.constant 0 : index
    %c0_34 = arith.constant 0 : index
    %35 = vector.load %arg8[%c1_32, %c0_33, %c0_34] : memref<2x8x4xf32, #tpu.memory_space<vmem>>, vector<1x8x4xf32>
    %36 = vector.shape_cast %35 : vector<1x8x4xf32> to vector<8x4xf32>
    %cst_35 = arith.constant dense<0.000000e+00> : vector<8x1xf32>
    %37 = tpu.matmul %36, %34, %cst_35 {dimension_numbers = #tpu.dot_dimension_numbers<[1], [0], [0], [1], [0, 0, 1, 1], [], []>} : vector<8x4xf32>, vector<4x1xf32>, vector<8x1xf32> -> vector<8x1xf32>
    %c1_36 = arith.constant 1 : index
    %c0_37 = arith.constant 0 : index
    %c0_38 = arith.constant 0 : index
    %38 = vector.load %arg9[%c1_36, %c0_37, %c0_38] : memref<2x8x1xf32, #tpu.memory_space<vmem>>, vector<1x8x1xf32>
    %39 = vector.shape_cast %38 : vector<1x8x1xf32> to vector<8x1xf32>
    %40 = arith.addf %37, %39 : vector<8x1xf32>
    %41 = arith.addf %22, %40 : vector<8x1xf32>
    %42 = arith.negf %41 : vector<8x1xf32>
    %43 = math.exp %42 : vector<8x1xf32>
    %cst_39 = arith.constant 1.000000e+00 : f32
    %44 = vector.broadcast %cst_39 : f32 to vector<8x1xf32>
    %45 = arith.addf %44, %43 : vector<8x1xf32>
    %46 = arith.divf %44, %45 : vector<8x1xf32>
    %c17_i32 = arith.constant 17 : i32
    %47 = tpu.dynamic_rotate %2 by %c17_i32 dim 1 : vector<8x256xf32>, i32 -> vector<8x256xf32>
    %48 = vector.extract_strided_slice %0 {offsets = [0, 0], sizes = [1, 256], strides = [1, 1]} : vector<9x256xf32> to vector<1x256xf32>
    %49 = vector.broadcast %48 : vector<1x256xf32> to vector<8x256xf32>
    %50 = arith.mulf %47, %49 : vector<8x256xf32>
    %c0_40 = arith.constant 0 : index
    %c0_41 = arith.constant 0 : index
    %51 = vector.load %arg12[%c0_40, %c0_41] : memref<80x256xf32, #tpu.memory_space<vmem>>, vector<8x256xf32>
    tpu.vector_store %arg12[%c0_40, %c0_41], %50 {strides = array<i32>} : memref<80x256xf32, #tpu.memory_space<vmem>>, vector<8x256xf32>,
    %c16_i32 = arith.constant 16 : i32
    %52 = tpu.dynamic_rotate %2 by %c16_i32 dim 1 : vector<8x256xf32>, i32 -> vector<8x256xf32>
    %53 = vector.extract_strided_slice %0 {offsets = [1, 0], sizes = [1, 256], strides = [1, 1]} : vector<9x256xf32> to vector<1x256xf32>
    %54 = vector.broadcast %53 : vector<1x256xf32> to vector<8x256xf32>
    %55 = arith.mulf %52, %54 : vector<8x256xf32>
    %c8 = arith.constant 8 : index
    %c0_42 = arith.constant 0 : index
    %56 = vector.load %arg12[%c8, %c0_42] : memref<80x256xf32, #tpu.memory_space<vmem>>, vector<8x256xf32>
    tpu.vector_store %arg12[%c8, %c0_42], %55 {strides = array<i32>} : memref<80x256xf32, #tpu.memory_space<vmem>>, vector<8x256xf32>,
    %c15_i32 = arith.constant 15 : i32
    %57 = tpu.dynamic_rotate %2 by %c15_i32 dim 1 : vector<8x256xf32>, i32 -> vector<8x256xf32>
    %58 = vector.extract_strided_slice %0 {offsets = [2, 0], sizes = [1, 256], strides = [1, 1]} : vector<9x256xf32> to vector<1x256xf32>
    %59 = vector.broadcast %58 : vector<1x256xf32> to vector<8x256xf32>
    %60 = arith.mulf %57, %59 : vector<8x256xf32>
    %c16 = arith.constant 16 : index
    %c0_43 = arith.constant 0 : index
    %61 = vector.load %arg12[%c16, %c0_43] : memref<80x256xf32, #tpu.memory_space<vmem>>, vector<8x256xf32>
    tpu.vector_store %arg12[%c16, %c0_43], %60 {strides = array<i32>} : memref<80x256xf32, #tpu.memory_space<vmem>>, vector<8x256xf32>,
    %c1_i32 = arith.constant 1 : i32
    %62 = tpu.dynamic_rotate %2 by %c1_i32 dim 1 : vector<8x256xf32>, i32 -> vector<8x256xf32>
    %63 = vector.extract_strided_slice %0 {offsets = [3, 0], sizes = [1, 256], strides = [1, 1]} : vector<9x256xf32> to vector<1x256xf32>
    %64 = vector.broadcast %63 : vector<1x256xf32> to vector<8x256xf32>
    %65 = arith.mulf %62, %64 : vector<8x256xf32>
    %c24 = arith.constant 24 : index
    %c0_44 = arith.constant 0 : index
    %66 = vector.load %arg12[%c24, %c0_44] : memref<80x256xf32, #tpu.memory_space<vmem>>, vector<8x256xf32>
    tpu.vector_store %arg12[%c24, %c0_44], %65 {strides = array<i32>} : memref<80x256xf32, #tpu.memory_space<vmem>>, vector<8x256xf32>,
    %67 = vector.extract_strided_slice %0 {offsets = [4, 0], sizes = [1, 256], strides = [1, 1]} : vector<9x256xf32> to vector<1x256xf32>
    %68 = vector.broadcast %67 : vector<1x256xf32> to vector<8x256xf32>
    %69 = arith.mulf %2, %68 : vector<8x256xf32>
    %c32 = arith.constant 32 : index
    %c0_45 = arith.constant 0 : index
    %70 = vector.load %arg12[%c32, %c0_45] : memref<80x256xf32, #tpu.memory_space<vmem>>, vector<8x256xf32>
    tpu.vector_store %arg12[%c32, %c0_45], %69 {strides = array<i32>} : memref<80x256xf32, #tpu.memory_space<vmem>>, vector<8x256xf32>,
    %c255_i32 = arith.constant 255 : i32
    %71 = tpu.dynamic_rotate %2 by %c255_i32 dim 1 : vector<8x256xf32>, i32 -> vector<8x256xf32>
    %72 = vector.extract_strided_slice %0 {offsets = [5, 0], sizes = [1, 256], strides = [1, 1]} : vector<9x256xf32> to vector<1x256xf32>
    %73 = vector.broadcast %72 : vector<1x256xf32> to vector<8x256xf32>
    %74 = arith.mulf %71, %73 : vector<8x256xf32>
    %c40 = arith.constant 40 : index
    %c0_46 = arith.constant 0 : index
    %75 = vector.load %arg12[%c40, %c0_46] : memref<80x256xf32, #tpu.memory_space<vmem>>, vector<8x256xf32>
    tpu.vector_store %arg12[%c40, %c0_46], %74 {strides = array<i32>} : memref<80x256xf32, #tpu.memory_space<vmem>>, vector<8x256xf32>,
    %c241_i32 = arith.constant 241 : i32
    %76 = tpu.dynamic_rotate %2 by %c241_i32 dim 1 : vector<8x256xf32>, i32 -> vector<8x256xf32>
    %77 = vector.extract_strided_slice %0 {offsets = [6, 0], sizes = [1, 256], strides = [1, 1]} : vector<9x256xf32> to vector<1x256xf32>
    %78 = vector.broadcast %77 : vector<1x256xf32> to vector<8x256xf32>
    %79 = arith.mulf %76, %78 : vector<8x256xf32>
    %c48 = arith.constant 48 : index
    %c0_47 = arith.constant 0 : index
    %80 = vector.load %arg12[%c48, %c0_47] : memref<80x256xf32, #tpu.memory_space<vmem>>, vector<8x256xf32>
    tpu.vector_store %arg12[%c48, %c0_47], %79 {strides = array<i32>} : memref<80x256xf32, #tpu.memory_space<vmem>>, vector<8x256xf32>,
    %c240_i32 = arith.constant 240 : i32
    %81 = tpu.dynamic_rotate %2 by %c240_i32 dim 1 : vector<8x256xf32>, i32 -> vector<8x256xf32>
    %82 = vector.extract_strided_slice %0 {offsets = [7, 0], sizes = [1, 256], strides = [1, 1]} : vector<9x256xf32> to vector<1x256xf32>
    %83 = vector.broadcast %82 : vector<1x256xf32> to vector<8x256xf32>
    %84 = arith.mulf %81, %83 : vector<8x256xf32>
    %c56 = arith.constant 56 : index
    %c0_48 = arith.constant 0 : index
    %85 = vector.load %arg12[%c56, %c0_48] : memref<80x256xf32, #tpu.memory_space<vmem>>, vector<8x256xf32>
    tpu.vector_store %arg12[%c56, %c0_48], %84 {strides = array<i32>} : memref<80x256xf32, #tpu.memory_space<vmem>>, vector<8x256xf32>,
    %c239_i32 = arith.constant 239 : i32
    %86 = tpu.dynamic_rotate %2 by %c239_i32 dim 1 : vector<8x256xf32>, i32 -> vector<8x256xf32>
    %87 = vector.extract_strided_slice %0 {offsets = [8, 0], sizes = [1, 256], strides = [1, 1]} : vector<9x256xf32> to vector<1x256xf32>
    %88 = vector.broadcast %87 : vector<1x256xf32> to vector<8x256xf32>
    %89 = arith.mulf %86, %88 : vector<8x256xf32>
    %c64 = arith.constant 64 : index
    %c0_49 = arith.constant 0 : index
    %90 = vector.load %arg12[%c64, %c0_49] : memref<80x256xf32, #tpu.memory_space<vmem>>, vector<8x256xf32>
    tpu.vector_store %arg12[%c64, %c0_49], %89 {strides = array<i32>} : memref<80x256xf32, #tpu.memory_space<vmem>>, vector<8x256xf32>,
    %c72 = arith.constant 72 : index
    %c0_50 = arith.constant 0 : index
    %91 = vector.load %arg12[%c72, %c0_50] : memref<80x256xf32, #tpu.memory_space<vmem>>, vector<8x256xf32>
    tpu.vector_store %arg12[%c72, %c0_50], %4 {strides = array<i32>} : memref<80x256xf32, #tpu.memory_space<vmem>>, vector<8x256xf32>,
    %c0_51 = arith.constant 0 : index
    %c0_52 = arith.constant 0 : index
    %c0_53 = arith.constant 0 : index
    %92 = vector.load %arg4[%c0_51, %c0_52, %c0_53] : memref<2x8x80xf32, #tpu.memory_space<vmem>>, vector<1x8x80xf32>
    %93 = vector.shape_cast %92 : vector<1x8x80xf32> to vector<8x80xf32>
    %c0_54 = arith.constant 0 : index
    %c0_55 = arith.constant 0 : index
    %94 = vector.load %arg12[%c0_54, %c0_55] : memref<80x256xf32, #tpu.memory_space<vmem>>, vector<80x256xf32>
    %cst_56 = arith.constant dense<0.000000e+00> : vector<8x256xf32>
    %95 = tpu.matmul %93, %94, %cst_56 {dimension_numbers = #tpu.dot_dimension_numbers<[1], [0], [0], [1], [0, 0, 1, 1], [], []>} : vector<8x80xf32>, vector<80x256xf32>, vector<8x256xf32> -> vector<8x256xf32>
    %c0_57 = arith.constant 0 : index
    %c0_58 = arith.constant 0 : index
    %c0_59 = arith.constant 0 : index
    %96 = vector.load %arg5[%c0_57, %c0_58, %c0_59] : memref<2x8x1xf32, #tpu.memory_space<vmem>>, vector<1x8x1xf32>
    %97 = vector.shape_cast %96 : vector<1x8x1xf32> to vector<8x1xf32>
    %98 = vector.broadcast %97 : vector<8x1xf32> to vector<8x256xf32>
    %99 = arith.addf %95, %98 : vector<8x256xf32>
    %100 = arith.addf %2, %99 : vector<8x256xf32>
    %101 = vector.broadcast %46 : vector<8x1xf32> to vector<8x256xf32>
    %102 = arith.mulf %100, %101 : vector<8x256xf32>
    %c0_60 = arith.constant 0 : index
    %c0_61 = arith.constant 0 : index
    %c0_62 = arith.constant 0 : index
    %103 = vector.load %arg10[%c0_60, %c0_61, %c0_62] : memref<2x8x256xf32, #tpu.memory_space<vmem>>, vector<1x8x256xf32>
    %104 = vector.shape_cast %103 : vector<1x8x256xf32> to vector<8x256xf32>
    %105 = vector.shape_cast %102 : vector<8x256xf32> to vector<1x8x256xf32>
    tpu.vector_store %arg10[%c0_60, %c0_61, %c0_62], %105 {strides = array<i32>} : memref<2x8x256xf32, #tpu.memory_space<vmem>>, vector<1x8x256xf32>,
    %c17_i32_63 = arith.constant 17 : i32
    %106 = tpu.dynamic_rotate %4 by %c17_i32_63 dim 1 : vector<8x256xf32>, i32 -> vector<8x256xf32>
    %107 = vector.extract_strided_slice %0 {offsets = [0, 0], sizes = [1, 256], strides = [1, 1]} : vector<9x256xf32> to vector<1x256xf32>
    %108 = vector.broadcast %107 : vector<1x256xf32> to vector<8x256xf32>
    %109 = arith.mulf %106, %108 : vector<8x256xf32>
    %c0_64 = arith.constant 0 : index
    %c0_65 = arith.constant 0 : index
    %110 = vector.load %arg12[%c0_64, %c0_65] : memref<80x256xf32, #tpu.memory_space<vmem>>, vector<8x256xf32>
    tpu.vector_store %arg12[%c0_64, %c0_65], %109 {strides = array<i32>} : memref<80x256xf32, #tpu.memory_space<vmem>>, vector<8x256xf32>,
    %c16_i32_66 = arith.constant 16 : i32
    %111 = tpu.dynamic_rotate %4 by %c16_i32_66 dim 1 : vector<8x256xf32>, i32 -> vector<8x256xf32>
    %112 = vector.extract_strided_slice %0 {offsets = [1, 0], sizes = [1, 256], strides = [1, 1]} : vector<9x256xf32> to vector<1x256xf32>
    %113 = vector.broadcast %112 : vector<1x256xf32> to vector<8x256xf32>
    %114 = arith.mulf %111, %113 : vector<8x256xf32>
    %c8_67 = arith.constant 8 : index
    %c0_68 = arith.constant 0 : index
    %115 = vector.load %arg12[%c8_67, %c0_68] : memref<80x256xf32, #tpu.memory_space<vmem>>, vector<8x256xf32>
    tpu.vector_store %arg12[%c8_67, %c0_68], %114 {strides = array<i32>} : memref<80x256xf32, #tpu.memory_space<vmem>>, vector<8x256xf32>,
    %c15_i32_69 = arith.constant 15 : i32
    %116 = tpu.dynamic_rotate %4 by %c15_i32_69 dim 1 : vector<8x256xf32>, i32 -> vector<8x256xf32>
    %117 = vector.extract_strided_slice %0 {offsets = [2, 0], sizes = [1, 256], strides = [1, 1]} : vector<9x256xf32> to vector<1x256xf32>
    %118 = vector.broadcast %117 : vector<1x256xf32> to vector<8x256xf32>
    %119 = arith.mulf %116, %118 : vector<8x256xf32>
    %c16_70 = arith.constant 16 : index
    %c0_71 = arith.constant 0 : index
    %120 = vector.load %arg12[%c16_70, %c0_71] : memref<80x256xf32, #tpu.memory_space<vmem>>, vector<8x256xf32>
    tpu.vector_store %arg12[%c16_70, %c0_71], %119 {strides = array<i32>} : memref<80x256xf32, #tpu.memory_space<vmem>>, vector<8x256xf32>,
    %c1_i32_72 = arith.constant 1 : i32
    %121 = tpu.dynamic_rotate %4 by %c1_i32_72 dim 1 : vector<8x256xf32>, i32 -> vector<8x256xf32>
    %122 = vector.extract_strided_slice %0 {offsets = [3, 0], sizes = [1, 256], strides = [1, 1]} : vector<9x256xf32> to vector<1x256xf32>
    %123 = vector.broadcast %122 : vector<1x256xf32> to vector<8x256xf32>
    %124 = arith.mulf %121, %123 : vector<8x256xf32>
    %c24_73 = arith.constant 24 : index
    %c0_74 = arith.constant 0 : index
    %125 = vector.load %arg12[%c24_73, %c0_74] : memref<80x256xf32, #tpu.memory_space<vmem>>, vector<8x256xf32>
    tpu.vector_store %arg12[%c24_73, %c0_74], %124 {strides = array<i32>} : memref<80x256xf32, #tpu.memory_space<vmem>>, vector<8x256xf32>,
    %126 = vector.extract_strided_slice %0 {offsets = [4, 0], sizes = [1, 256], strides = [1, 1]} : vector<9x256xf32> to vector<1x256xf32>
    %127 = vector.broadcast %126 : vector<1x256xf32> to vector<8x256xf32>
    %128 = arith.mulf %4, %127 : vector<8x256xf32>
    %c32_75 = arith.constant 32 : index
    %c0_76 = arith.constant 0 : index
    %129 = vector.load %arg12[%c32_75, %c0_76] : memref<80x256xf32, #tpu.memory_space<vmem>>, vector<8x256xf32>
    tpu.vector_store %arg12[%c32_75, %c0_76], %128 {strides = array<i32>} : memref<80x256xf32, #tpu.memory_space<vmem>>, vector<8x256xf32>,
    %c255_i32_77 = arith.constant 255 : i32
    %130 = tpu.dynamic_rotate %4 by %c255_i32_77 dim 1 : vector<8x256xf32>, i32 -> vector<8x256xf32>
    %131 = vector.extract_strided_slice %0 {offsets = [5, 0], sizes = [1, 256], strides = [1, 1]} : vector<9x256xf32> to vector<1x256xf32>
    %132 = vector.broadcast %131 : vector<1x256xf32> to vector<8x256xf32>
    %133 = arith.mulf %130, %132 : vector<8x256xf32>
    %c40_78 = arith.constant 40 : index
    %c0_79 = arith.constant 0 : index
    %134 = vector.load %arg12[%c40_78, %c0_79] : memref<80x256xf32, #tpu.memory_space<vmem>>, vector<8x256xf32>
    tpu.vector_store %arg12[%c40_78, %c0_79], %133 {strides = array<i32>} : memref<80x256xf32, #tpu.memory_space<vmem>>, vector<8x256xf32>,
    %c241_i32_80 = arith.constant 241 : i32
    %135 = tpu.dynamic_rotate %4 by %c241_i32_80 dim 1 : vector<8x256xf32>, i32 -> vector<8x256xf32>
    %136 = vector.extract_strided_slice %0 {offsets = [6, 0], sizes = [1, 256], strides = [1, 1]} : vector<9x256xf32> to vector<1x256xf32>
    %137 = vector.broadcast %136 : vector<1x256xf32> to vector<8x256xf32>
    %138 = arith.mulf %135, %137 : vector<8x256xf32>
    %c48_81 = arith.constant 48 : index
    %c0_82 = arith.constant 0 : index
    %139 = vector.load %arg12[%c48_81, %c0_82] : memref<80x256xf32, #tpu.memory_space<vmem>>, vector<8x256xf32>
    tpu.vector_store %arg12[%c48_81, %c0_82], %138 {strides = array<i32>} : memref<80x256xf32, #tpu.memory_space<vmem>>, vector<8x256xf32>,
    %c240_i32_83 = arith.constant 240 : i32
    %140 = tpu.dynamic_rotate %4 by %c240_i32_83 dim 1 : vector<8x256xf32>, i32 -> vector<8x256xf32>
    %141 = vector.extract_strided_slice %0 {offsets = [7, 0], sizes = [1, 256], strides = [1, 1]} : vector<9x256xf32> to vector<1x256xf32>
    %142 = vector.broadcast %141 : vector<1x256xf32> to vector<8x256xf32>
    %143 = arith.mulf %140, %142 : vector<8x256xf32>
    %c56_84 = arith.constant 56 : index
    %c0_85 = arith.constant 0 : index
    %144 = vector.load %arg12[%c56_84, %c0_85] : memref<80x256xf32, #tpu.memory_space<vmem>>, vector<8x256xf32>
    tpu.vector_store %arg12[%c56_84, %c0_85], %143 {strides = array<i32>} : memref<80x256xf32, #tpu.memory_space<vmem>>, vector<8x256xf32>,
    %c239_i32_86 = arith.constant 239 : i32
    %145 = tpu.dynamic_rotate %4 by %c239_i32_86 dim 1 : vector<8x256xf32>, i32 -> vector<8x256xf32>
    %146 = vector.extract_strided_slice %0 {offsets = [8, 0], sizes = [1, 256], strides = [1, 1]} : vector<9x256xf32> to vector<1x256xf32>
    %147 = vector.broadcast %146 : vector<1x256xf32> to vector<8x256xf32>
    %148 = arith.mulf %145, %147 : vector<8x256xf32>
    %c64_87 = arith.constant 64 : index
    %c0_88 = arith.constant 0 : index
    %149 = vector.load %arg12[%c64_87, %c0_88] : memref<80x256xf32, #tpu.memory_space<vmem>>, vector<8x256xf32>
    tpu.vector_store %arg12[%c64_87, %c0_88], %148 {strides = array<i32>} : memref<80x256xf32, #tpu.memory_space<vmem>>, vector<8x256xf32>,
    %c72_89 = arith.constant 72 : index
    %c0_90 = arith.constant 0 : index
    %150 = vector.load %arg12[%c72_89, %c0_90] : memref<80x256xf32, #tpu.memory_space<vmem>>, vector<8x256xf32>
    tpu.vector_store %arg12[%c72_89, %c0_90], %2 {strides = array<i32>} : memref<80x256xf32, #tpu.memory_space<vmem>>, vector<8x256xf32>,
    %c1_91 = arith.constant 1 : index
    %c0_92 = arith.constant 0 : index
    %c0_93 = arith.constant 0 : index
    %151 = vector.load %arg4[%c1_91, %c0_92, %c0_93] : memref<2x8x80xf32, #tpu.memory_space<vmem>>, vector<1x8x80xf32>
    %152 = vector.shape_cast %151 : vector<1x8x80xf32> to vector<8x80xf32>
    %c0_94 = arith.constant 0 : index
    %c0_95 = arith.constant 0 : index
    %153 = vector.load %arg12[%c0_94, %c0_95] : memref<80x256xf32, #tpu.memory_space<vmem>>, vector<80x256xf32>
    %cst_96 = arith.constant dense<0.000000e+00> : vector<8x256xf32>
    %154 = tpu.matmul %152, %153, %cst_96 {dimension_numbers = #tpu.dot_dimension_numbers<[1], [0], [0], [1], [0, 0, 1, 1], [], []>} : vector<8x80xf32>, vector<80x256xf32>, vector<8x256xf32> -> vector<8x256xf32>
    %c1_97 = arith.constant 1 : index
    %c0_98 = arith.constant 0 : index
    %c0_99 = arith.constant 0 : index
    %155 = vector.load %arg5[%c1_97, %c0_98, %c0_99] : memref<2x8x1xf32, #tpu.memory_space<vmem>>, vector<1x8x1xf32>
    %156 = vector.shape_cast %155 : vector<1x8x1xf32> to vector<8x1xf32>
    %157 = vector.broadcast %156 : vector<8x1xf32> to vector<8x256xf32>
    %158 = arith.addf %154, %157 : vector<8x256xf32>
    %159 = arith.addf %4, %158 : vector<8x256xf32>
    %160 = vector.broadcast %46 : vector<8x1xf32> to vector<8x256xf32>
    %161 = arith.mulf %159, %160 : vector<8x256xf32>
    %c0_100 = arith.constant 0 : index
    %c0_101 = arith.constant 0 : index
    %c0_102 = arith.constant 0 : index
    %162 = vector.load %arg11[%c0_100, %c0_101, %c0_102] : memref<2x8x256xf32, #tpu.memory_space<vmem>>, vector<1x8x256xf32>
    %163 = vector.shape_cast %162 : vector<1x8x256xf32> to vector<8x256xf32>
    %164 = vector.shape_cast %161 : vector<8x256xf32> to vector<1x8x256xf32>
    tpu.vector_store %arg11[%c0_100, %c0_101, %c0_102], %164 {strides = array<i32>} : memref<2x8x256xf32, #tpu.memory_space<vmem>>, vector<1x8x256xf32>,
    %c1_103 = arith.constant 1 : index
    %c0_104 = arith.constant 0 : index
    %c0_105 = arith.constant 0 : index
    %165 = vector.load %arg1[%c1_103, %c0_104, %c0_105] : memref<2x8x256xf32, #tpu.memory_space<vmem>>, vector<1x8x256xf32>
    %166 = vector.shape_cast %165 : vector<1x8x256xf32> to vector<8x256xf32>
    %c1_106 = arith.constant 1 : index
    %c0_107 = arith.constant 0 : index
    %c0_108 = arith.constant 0 : index
    %167 = vector.load %arg2[%c1_106, %c0_107, %c0_108] : memref<2x8x256xf32, #tpu.memory_space<vmem>>, vector<1x8x256xf32>
    %168 = vector.shape_cast %167 : vector<1x8x256xf32> to vector<8x256xf32>
    %cst_109 = arith.constant dense<0.000000e+00> : vector<8xf32>
    %169 = vector.multi_reduction <add>, %166, %cst_109 [1] : vector<8x256xf32> to vector<8xf32>
    %170 = vector.shape_cast %169 : vector<8xf32> to vector<8x1xf32>
    %cst_110 = arith.constant 2.560000e+02 : f32
    %171 = vector.broadcast %cst_110 : f32 to vector<8x1xf32>
    %172 = arith.divf %170, %171 : vector<8x1xf32>
    %c0_111 = arith.constant 0 : index
    %c0_112 = arith.constant 0 : index
    %c0_113 = arith.constant 0 : index
    %173 = vector.load %arg6[%c0_111, %c0_112, %c0_113] : memref<2x4x8xf32, #tpu.memory_space<vmem>>, vector<1x4x8xf32>
    %174 = vector.shape_cast %173 : vector<1x4x8xf32> to vector<4x8xf32>
    %cst_114 = arith.constant dense<0.000000e+00> : vector<4x1xf32>
    %175 = tpu.matmul %174, %172, %cst_114 {dimension_numbers = #tpu.dot_dimension_numbers<[1], [0], [0], [1], [0, 0, 1, 1], [], []>} : vector<4x8xf32>, vector<8x1xf32>, vector<4x1xf32> -> vector<4x1xf32>
    %c0_115 = arith.constant 0 : index
    %c0_116 = arith.constant 0 : index
    %c0_117 = arith.constant 0 : index
    %176 = vector.load %arg7[%c0_115, %c0_116, %c0_117] : memref<2x4x1xf32, #tpu.memory_space<vmem>>, vector<1x4x1xf32>
    %177 = vector.shape_cast %176 : vector<1x4x1xf32> to vector<4x1xf32>
    %178 = arith.addf %175, %177 : vector<4x1xf32>
    %cst_118 = arith.constant 0.000000e+00 : f32
    %179 = vector.broadcast %cst_118 : f32 to vector<4x1xf32>
    %180 = arith.maximumf %178, %179 : vector<4x1xf32>
    %c0_119 = arith.constant 0 : index
    %c0_120 = arith.constant 0 : index
    %c0_121 = arith.constant 0 : index
    %181 = vector.load %arg8[%c0_119, %c0_120, %c0_121] : memref<2x8x4xf32, #tpu.memory_space<vmem>>, vector<1x8x4xf32>
    %182 = vector.shape_cast %181 : vector<1x8x4xf32> to vector<8x4xf32>
    %cst_122 = arith.constant dense<0.000000e+00> : vector<8x1xf32>
    %183 = tpu.matmul %182, %180, %cst_122 {dimension_numbers = #tpu.dot_dimension_numbers<[1], [0], [0], [1], [0, 0, 1, 1], [], []>} : vector<8x4xf32>, vector<4x1xf32>, vector<8x1xf32> -> vector<8x1xf32>
    %c0_123 = arith.constant 0 : index
    %c0_124 = arith.constant 0 : index
    %c0_125 = arith.constant 0 : index
    %184 = vector.load %arg9[%c0_123, %c0_124, %c0_125] : memref<2x8x1xf32, #tpu.memory_space<vmem>>, vector<1x8x1xf32>
    %185 = vector.shape_cast %184 : vector<1x8x1xf32> to vector<8x1xf32>
    %186 = arith.addf %183, %185 : vector<8x1xf32>
    %cst_126 = arith.constant dense<0.000000e+00> : vector<8xf32>
    %187 = vector.multi_reduction <add>, %168, %cst_126 [1] : vector<8x256xf32> to vector<8xf32>
    %188 = vector.shape_cast %187 : vector<8xf32> to vector<8x1xf32>
    %cst_127 = arith.constant 2.560000e+02 : f32
    %189 = vector.broadcast %cst_127 : f32 to vector<8x1xf32>
    %190 = arith.divf %188, %189 : vector<8x1xf32>
    %c1_128 = arith.constant 1 : index
    %c0_129 = arith.constant 0 : index
    %c0_130 = arith.constant 0 : index
    %191 = vector.load %arg6[%c1_128, %c0_129, %c0_130] : memref<2x4x8xf32, #tpu.memory_space<vmem>>, vector<1x4x8xf32>
    %192 = vector.shape_cast %191 : vector<1x4x8xf32> to vector<4x8xf32>
    %cst_131 = arith.constant dense<0.000000e+00> : vector<4x1xf32>
    %193 = tpu.matmul %192, %190, %cst_131 {dimension_numbers = #tpu.dot_dimension_numbers<[1], [0], [0], [1], [0, 0, 1, 1], [], []>} : vector<4x8xf32>, vector<8x1xf32>, vector<4x1xf32> -> vector<4x1xf32>
    %c1_132 = arith.constant 1 : index
    %c0_133 = arith.constant 0 : index
    %c0_134 = arith.constant 0 : index
    %194 = vector.load %arg7[%c1_132, %c0_133, %c0_134] : memref<2x4x1xf32, #tpu.memory_space<vmem>>, vector<1x4x1xf32>
    %195 = vector.shape_cast %194 : vector<1x4x1xf32> to vector<4x1xf32>
    %196 = arith.addf %193, %195 : vector<4x1xf32>
    %cst_135 = arith.constant 0.000000e+00 : f32
    %197 = vector.broadcast %cst_135 : f32 to vector<4x1xf32>
    %198 = arith.maximumf %196, %197 : vector<4x1xf32>
    %c1_136 = arith.constant 1 : index
    %c0_137 = arith.constant 0 : index
    %c0_138 = arith.constant 0 : index
    %199 = vector.load %arg8[%c1_136, %c0_137, %c0_138] : memref<2x8x4xf32, #tpu.memory_space<vmem>>, vector<1x8x4xf32>
    %200 = vector.shape_cast %199 : vector<1x8x4xf32> to vector<8x4xf32>
    %cst_139 = arith.constant dense<0.000000e+00> : vector<8x1xf32>
    %201 = tpu.matmul %200, %198, %cst_139 {dimension_numbers = #tpu.dot_dimension_numbers<[1], [0], [0], [1], [0, 0, 1, 1], [], []>} : vector<8x4xf32>, vector<4x1xf32>, vector<8x1xf32> -> vector<8x1xf32>
    %c1_140 = arith.constant 1 : index
    %c0_141 = arith.constant 0 : index
    %c0_142 = arith.constant 0 : index
    %202 = vector.load %arg9[%c1_140, %c0_141, %c0_142] : memref<2x8x1xf32, #tpu.memory_space<vmem>>, vector<1x8x1xf32>
    %203 = vector.shape_cast %202 : vector<1x8x1xf32> to vector<8x1xf32>
    %204 = arith.addf %201, %203 : vector<8x1xf32>
    %205 = arith.addf %186, %204 : vector<8x1xf32>
    %206 = arith.negf %205 : vector<8x1xf32>
    %207 = math.exp %206 : vector<8x1xf32>
    %cst_143 = arith.constant 1.000000e+00 : f32
    %208 = vector.broadcast %cst_143 : f32 to vector<8x1xf32>
    %209 = arith.addf %208, %207 : vector<8x1xf32>
    %210 = arith.divf %208, %209 : vector<8x1xf32>
    %c17_i32_144 = arith.constant 17 : i32
    %211 = tpu.dynamic_rotate %166 by %c17_i32_144 dim 1 : vector<8x256xf32>, i32 -> vector<8x256xf32>
    %212 = vector.extract_strided_slice %0 {offsets = [0, 0], sizes = [1, 256], strides = [1, 1]} : vector<9x256xf32> to vector<1x256xf32>
    %213 = vector.broadcast %212 : vector<1x256xf32> to vector<8x256xf32>
    %214 = arith.mulf %211, %213 : vector<8x256xf32>
    %c0_145 = arith.constant 0 : index
    %c0_146 = arith.constant 0 : index
    %215 = vector.load %arg12[%c0_145, %c0_146] : memref<80x256xf32, #tpu.memory_space<vmem>>, vector<8x256xf32>
    tpu.vector_store %arg12[%c0_145, %c0_146], %214 {strides = array<i32>} : memref<80x256xf32, #tpu.memory_space<vmem>>, vector<8x256xf32>,
    %c16_i32_147 = arith.constant 16 : i32
    %216 = tpu.dynamic_rotate %166 by %c16_i32_147 dim 1 : vector<8x256xf32>, i32 -> vector<8x256xf32>
    %217 = vector.extract_strided_slice %0 {offsets = [1, 0], sizes = [1, 256], strides = [1, 1]} : vector<9x256xf32> to vector<1x256xf32>
    %218 = vector.broadcast %217 : vector<1x256xf32> to vector<8x256xf32>
    %219 = arith.mulf %216, %218 : vector<8x256xf32>
    %c8_148 = arith.constant 8 : index
    %c0_149 = arith.constant 0 : index
    %220 = vector.load %arg12[%c8_148, %c0_149] : memref<80x256xf32, #tpu.memory_space<vmem>>, vector<8x256xf32>
    tpu.vector_store %arg12[%c8_148, %c0_149], %219 {strides = array<i32>} : memref<80x256xf32, #tpu.memory_space<vmem>>, vector<8x256xf32>,
    %c15_i32_150 = arith.constant 15 : i32
    %221 = tpu.dynamic_rotate %166 by %c15_i32_150 dim 1 : vector<8x256xf32>, i32 -> vector<8x256xf32>
    %222 = vector.extract_strided_slice %0 {offsets = [2, 0], sizes = [1, 256], strides = [1, 1]} : vector<9x256xf32> to vector<1x256xf32>
    %223 = vector.broadcast %222 : vector<1x256xf32> to vector<8x256xf32>
    %224 = arith.mulf %221, %223 : vector<8x256xf32>
    %c16_151 = arith.constant 16 : index
    %c0_152 = arith.constant 0 : index
    %225 = vector.load %arg12[%c16_151, %c0_152] : memref<80x256xf32, #tpu.memory_space<vmem>>, vector<8x256xf32>
    tpu.vector_store %arg12[%c16_151, %c0_152], %224 {strides = array<i32>} : memref<80x256xf32, #tpu.memory_space<vmem>>, vector<8x256xf32>,
    %c1_i32_153 = arith.constant 1 : i32
    %226 = tpu.dynamic_rotate %166 by %c1_i32_153 dim 1 : vector<8x256xf32>, i32 -> vector<8x256xf32>
    %227 = vector.extract_strided_slice %0 {offsets = [3, 0], sizes = [1, 256], strides = [1, 1]} : vector<9x256xf32> to vector<1x256xf32>
    %228 = vector.broadcast %227 : vector<1x256xf32> to vector<8x256xf32>
    %229 = arith.mulf %226, %228 : vector<8x256xf32>
    %c24_154 = arith.constant 24 : index
    %c0_155 = arith.constant 0 : index
    %230 = vector.load %arg12[%c24_154, %c0_155] : memref<80x256xf32, #tpu.memory_space<vmem>>, vector<8x256xf32>
    tpu.vector_store %arg12[%c24_154, %c0_155], %229 {strides = array<i32>} : memref<80x256xf32, #tpu.memory_space<vmem>>, vector<8x256xf32>,
    %231 = vector.extract_strided_slice %0 {offsets = [4, 0], sizes = [1, 256], strides = [1, 1]} : vector<9x256xf32> to vector<1x256xf32>
    %232 = vector.broadcast %231 : vector<1x256xf32> to vector<8x256xf32>
    %233 = arith.mulf %166, %232 : vector<8x256xf32>
    %c32_156 = arith.constant 32 : index
    %c0_157 = arith.constant 0 : index
    %234 = vector.load %arg12[%c32_156, %c0_157] : memref<80x256xf32, #tpu.memory_space<vmem>>, vector<8x256xf32>
    tpu.vector_store %arg12[%c32_156, %c0_157], %233 {strides = array<i32>} : memref<80x256xf32, #tpu.memory_space<vmem>>, vector<8x256xf32>,
    %c255_i32_158 = arith.constant 255 : i32
    %235 = tpu.dynamic_rotate %166 by %c255_i32_158 dim 1 : vector<8x256xf32>, i32 -> vector<8x256xf32>
    %236 = vector.extract_strided_slice %0 {offsets = [5, 0], sizes = [1, 256], strides = [1, 1]} : vector<9x256xf32> to vector<1x256xf32>
    %237 = vector.broadcast %236 : vector<1x256xf32> to vector<8x256xf32>
    %238 = arith.mulf %235, %237 : vector<8x256xf32>
    %c40_159 = arith.constant 40 : index
    %c0_160 = arith.constant 0 : index
    %239 = vector.load %arg12[%c40_159, %c0_160] : memref<80x256xf32, #tpu.memory_space<vmem>>, vector<8x256xf32>
    tpu.vector_store %arg12[%c40_159, %c0_160], %238 {strides = array<i32>} : memref<80x256xf32, #tpu.memory_space<vmem>>, vector<8x256xf32>,
    %c241_i32_161 = arith.constant 241 : i32
    %240 = tpu.dynamic_rotate %166 by %c241_i32_161 dim 1 : vector<8x256xf32>, i32 -> vector<8x256xf32>
    %241 = vector.extract_strided_slice %0 {offsets = [6, 0], sizes = [1, 256], strides = [1, 1]} : vector<9x256xf32> to vector<1x256xf32>
    %242 = vector.broadcast %241 : vector<1x256xf32> to vector<8x256xf32>
    %243 = arith.mulf %240, %242 : vector<8x256xf32>
    %c48_162 = arith.constant 48 : index
    %c0_163 = arith.constant 0 : index
    %244 = vector.load %arg12[%c48_162, %c0_163] : memref<80x256xf32, #tpu.memory_space<vmem>>, vector<8x256xf32>
    tpu.vector_store %arg12[%c48_162, %c0_163], %243 {strides = array<i32>} : memref<80x256xf32, #tpu.memory_space<vmem>>, vector<8x256xf32>,
    %c240_i32_164 = arith.constant 240 : i32
    %245 = tpu.dynamic_rotate %166 by %c240_i32_164 dim 1 : vector<8x256xf32>, i32 -> vector<8x256xf32>
    %246 = vector.extract_strided_slice %0 {offsets = [7, 0], sizes = [1, 256], strides = [1, 1]} : vector<9x256xf32> to vector<1x256xf32>
    %247 = vector.broadcast %246 : vector<1x256xf32> to vector<8x256xf32>
    %248 = arith.mulf %245, %247 : vector<8x256xf32>
    %c56_165 = arith.constant 56 : index
    %c0_166 = arith.constant 0 : index
    %249 = vector.load %arg12[%c56_165, %c0_166] : memref<80x256xf32, #tpu.memory_space<vmem>>, vector<8x256xf32>
    tpu.vector_store %arg12[%c56_165, %c0_166], %248 {strides = array<i32>} : memref<80x256xf32, #tpu.memory_space<vmem>>, vector<8x256xf32>,
    %c239_i32_167 = arith.constant 239 : i32
    %250 = tpu.dynamic_rotate %166 by %c239_i32_167 dim 1 : vector<8x256xf32>, i32 -> vector<8x256xf32>
    %251 = vector.extract_strided_slice %0 {offsets = [8, 0], sizes = [1, 256], strides = [1, 1]} : vector<9x256xf32> to vector<1x256xf32>
    %252 = vector.broadcast %251 : vector<1x256xf32> to vector<8x256xf32>
    %253 = arith.mulf %250, %252 : vector<8x256xf32>
    %c64_168 = arith.constant 64 : index
    %c0_169 = arith.constant 0 : index
    %254 = vector.load %arg12[%c64_168, %c0_169] : memref<80x256xf32, #tpu.memory_space<vmem>>, vector<8x256xf32>
    tpu.vector_store %arg12[%c64_168, %c0_169], %253 {strides = array<i32>} : memref<80x256xf32, #tpu.memory_space<vmem>>, vector<8x256xf32>,
    %c72_170 = arith.constant 72 : index
    %c0_171 = arith.constant 0 : index
    %255 = vector.load %arg12[%c72_170, %c0_171] : memref<80x256xf32, #tpu.memory_space<vmem>>, vector<8x256xf32>
    tpu.vector_store %arg12[%c72_170, %c0_171], %168 {strides = array<i32>} : memref<80x256xf32, #tpu.memory_space<vmem>>, vector<8x256xf32>,
    %c0_172 = arith.constant 0 : index
    %c0_173 = arith.constant 0 : index
    %c0_174 = arith.constant 0 : index
    %256 = vector.load %arg4[%c0_172, %c0_173, %c0_174] : memref<2x8x80xf32, #tpu.memory_space<vmem>>, vector<1x8x80xf32>
    %257 = vector.shape_cast %256 : vector<1x8x80xf32> to vector<8x80xf32>
    %c0_175 = arith.constant 0 : index
    %c0_176 = arith.constant 0 : index
    %258 = vector.load %arg12[%c0_175, %c0_176] : memref<80x256xf32, #tpu.memory_space<vmem>>, vector<80x256xf32>
    %cst_177 = arith.constant dense<0.000000e+00> : vector<8x256xf32>
    %259 = tpu.matmul %257, %258, %cst_177 {dimension_numbers = #tpu.dot_dimension_numbers<[1], [0], [0], [1], [0, 0, 1, 1], [], []>} : vector<8x80xf32>, vector<80x256xf32>, vector<8x256xf32> -> vector<8x256xf32>
    %c0_178 = arith.constant 0 : index
    %c0_179 = arith.constant 0 : index
    %c0_180 = arith.constant 0 : index
    %260 = vector.load %arg5[%c0_178, %c0_179, %c0_180] : memref<2x8x1xf32, #tpu.memory_space<vmem>>, vector<1x8x1xf32>
    %261 = vector.shape_cast %260 : vector<1x8x1xf32> to vector<8x1xf32>
    %262 = vector.broadcast %261 : vector<8x1xf32> to vector<8x256xf32>
    %263 = arith.addf %259, %262 : vector<8x256xf32>
    %264 = arith.addf %166, %263 : vector<8x256xf32>
    %265 = vector.broadcast %210 : vector<8x1xf32> to vector<8x256xf32>
    %266 = arith.mulf %264, %265 : vector<8x256xf32>
    %c1_181 = arith.constant 1 : index
    %c0_182 = arith.constant 0 : index
    %c0_183 = arith.constant 0 : index
    %267 = vector.load %arg10[%c1_181, %c0_182, %c0_183] : memref<2x8x256xf32, #tpu.memory_space<vmem>>, vector<1x8x256xf32>
    %268 = vector.shape_cast %267 : vector<1x8x256xf32> to vector<8x256xf32>
    %269 = vector.shape_cast %266 : vector<8x256xf32> to vector<1x8x256xf32>
    tpu.vector_store %arg10[%c1_181, %c0_182, %c0_183], %269 {strides = array<i32>} : memref<2x8x256xf32, #tpu.memory_space<vmem>>, vector<1x8x256xf32>,
    %c17_i32_184 = arith.constant 17 : i32
    %270 = tpu.dynamic_rotate %168 by %c17_i32_184 dim 1 : vector<8x256xf32>, i32 -> vector<8x256xf32>
    %271 = vector.extract_strided_slice %0 {offsets = [0, 0], sizes = [1, 256], strides = [1, 1]} : vector<9x256xf32> to vector<1x256xf32>
    %272 = vector.broadcast %271 : vector<1x256xf32> to vector<8x256xf32>
    %273 = arith.mulf %270, %272 : vector<8x256xf32>
    %c0_185 = arith.constant 0 : index
    %c0_186 = arith.constant 0 : index
    %274 = vector.load %arg12[%c0_185, %c0_186] : memref<80x256xf32, #tpu.memory_space<vmem>>, vector<8x256xf32>
    tpu.vector_store %arg12[%c0_185, %c0_186], %273 {strides = array<i32>} : memref<80x256xf32, #tpu.memory_space<vmem>>, vector<8x256xf32>,
    %c16_i32_187 = arith.constant 16 : i32
    %275 = tpu.dynamic_rotate %168 by %c16_i32_187 dim 1 : vector<8x256xf32>, i32 -> vector<8x256xf32>
    %276 = vector.extract_strided_slice %0 {offsets = [1, 0], sizes = [1, 256], strides = [1, 1]} : vector<9x256xf32> to vector<1x256xf32>
    %277 = vector.broadcast %276 : vector<1x256xf32> to vector<8x256xf32>
    %278 = arith.mulf %275, %277 : vector<8x256xf32>
    %c8_188 = arith.constant 8 : index
    %c0_189 = arith.constant 0 : index
    %279 = vector.load %arg12[%c8_188, %c0_189] : memref<80x256xf32, #tpu.memory_space<vmem>>, vector<8x256xf32>
    tpu.vector_store %arg12[%c8_188, %c0_189], %278 {strides = array<i32>} : memref<80x256xf32, #tpu.memory_space<vmem>>, vector<8x256xf32>,
    %c15_i32_190 = arith.constant 15 : i32
    %280 = tpu.dynamic_rotate %168 by %c15_i32_190 dim 1 : vector<8x256xf32>, i32 -> vector<8x256xf32>
    %281 = vector.extract_strided_slice %0 {offsets = [2, 0], sizes = [1, 256], strides = [1, 1]} : vector<9x256xf32> to vector<1x256xf32>
    %282 = vector.broadcast %281 : vector<1x256xf32> to vector<8x256xf32>
    %283 = arith.mulf %280, %282 : vector<8x256xf32>
    %c16_191 = arith.constant 16 : index
    %c0_192 = arith.constant 0 : index
    %284 = vector.load %arg12[%c16_191, %c0_192] : memref<80x256xf32, #tpu.memory_space<vmem>>, vector<8x256xf32>
    tpu.vector_store %arg12[%c16_191, %c0_192], %283 {strides = array<i32>} : memref<80x256xf32, #tpu.memory_space<vmem>>, vector<8x256xf32>,
    %c1_i32_193 = arith.constant 1 : i32
    %285 = tpu.dynamic_rotate %168 by %c1_i32_193 dim 1 : vector<8x256xf32>, i32 -> vector<8x256xf32>
    %286 = vector.extract_strided_slice %0 {offsets = [3, 0], sizes = [1, 256], strides = [1, 1]} : vector<9x256xf32> to vector<1x256xf32>
    %287 = vector.broadcast %286 : vector<1x256xf32> to vector<8x256xf32>
    %288 = arith.mulf %285, %287 : vector<8x256xf32>
    %c24_194 = arith.constant 24 : index
    %c0_195 = arith.constant 0 : index
    %289 = vector.load %arg12[%c24_194, %c0_195] : memref<80x256xf32, #tpu.memory_space<vmem>>, vector<8x256xf32>
    tpu.vector_store %arg12[%c24_194, %c0_195], %288 {strides = array<i32>} : memref<80x256xf32, #tpu.memory_space<vmem>>, vector<8x256xf32>,
    %290 = vector.extract_strided_slice %0 {offsets = [4, 0], sizes = [1, 256], strides = [1, 1]} : vector<9x256xf32> to vector<1x256xf32>
    %291 = vector.broadcast %290 : vector<1x256xf32> to vector<8x256xf32>
    %292 = arith.mulf %168, %291 : vector<8x256xf32>
    %c32_196 = arith.constant 32 : index
    %c0_197 = arith.constant 0 : index
    %293 = vector.load %arg12[%c32_196, %c0_197] : memref<80x256xf32, #tpu.memory_space<vmem>>, vector<8x256xf32>
    tpu.vector_store %arg12[%c32_196, %c0_197], %292 {strides = array<i32>} : memref<80x256xf32, #tpu.memory_space<vmem>>, vector<8x256xf32>,
    %c255_i32_198 = arith.constant 255 : i32
    %294 = tpu.dynamic_rotate %168 by %c255_i32_198 dim 1 : vector<8x256xf32>, i32 -> vector<8x256xf32>
    %295 = vector.extract_strided_slice %0 {offsets = [5, 0], sizes = [1, 256], strides = [1, 1]} : vector<9x256xf32> to vector<1x256xf32>
    %296 = vector.broadcast %295 : vector<1x256xf32> to vector<8x256xf32>
    %297 = arith.mulf %294, %296 : vector<8x256xf32>
    %c40_199 = arith.constant 40 : index
    %c0_200 = arith.constant 0 : index
    %298 = vector.load %arg12[%c40_199, %c0_200] : memref<80x256xf32, #tpu.memory_space<vmem>>, vector<8x256xf32>
    tpu.vector_store %arg12[%c40_199, %c0_200], %297 {strides = array<i32>} : memref<80x256xf32, #tpu.memory_space<vmem>>, vector<8x256xf32>,
    %c241_i32_201 = arith.constant 241 : i32
    %299 = tpu.dynamic_rotate %168 by %c241_i32_201 dim 1 : vector<8x256xf32>, i32 -> vector<8x256xf32>
    %300 = vector.extract_strided_slice %0 {offsets = [6, 0], sizes = [1, 256], strides = [1, 1]} : vector<9x256xf32> to vector<1x256xf32>
    %301 = vector.broadcast %300 : vector<1x256xf32> to vector<8x256xf32>
    %302 = arith.mulf %299, %301 : vector<8x256xf32>
    %c48_202 = arith.constant 48 : index
    %c0_203 = arith.constant 0 : index
    %303 = vector.load %arg12[%c48_202, %c0_203] : memref<80x256xf32, #tpu.memory_space<vmem>>, vector<8x256xf32>
    tpu.vector_store %arg12[%c48_202, %c0_203], %302 {strides = array<i32>} : memref<80x256xf32, #tpu.memory_space<vmem>>, vector<8x256xf32>,
    %c240_i32_204 = arith.constant 240 : i32
    %304 = tpu.dynamic_rotate %168 by %c240_i32_204 dim 1 : vector<8x256xf32>, i32 -> vector<8x256xf32>
    %305 = vector.extract_strided_slice %0 {offsets = [7, 0], sizes = [1, 256], strides = [1, 1]} : vector<9x256xf32> to vector<1x256xf32>
    %306 = vector.broadcast %305 : vector<1x256xf32> to vector<8x256xf32>
    %307 = arith.mulf %304, %306 : vector<8x256xf32>
    %c56_205 = arith.constant 56 : index
    %c0_206 = arith.constant 0 : index
    %308 = vector.load %arg12[%c56_205, %c0_206] : memref<80x256xf32, #tpu.memory_space<vmem>>, vector<8x256xf32>
    tpu.vector_store %arg12[%c56_205, %c0_206], %307 {strides = array<i32>} : memref<80x256xf32, #tpu.memory_space<vmem>>, vector<8x256xf32>,
    %c239_i32_207 = arith.constant 239 : i32
    %309 = tpu.dynamic_rotate %168 by %c239_i32_207 dim 1 : vector<8x256xf32>, i32 -> vector<8x256xf32>
    %310 = vector.extract_strided_slice %0 {offsets = [8, 0], sizes = [1, 256], strides = [1, 1]} : vector<9x256xf32> to vector<1x256xf32>
    %311 = vector.broadcast %310 : vector<1x256xf32> to vector<8x256xf32>
    %312 = arith.mulf %309, %311 : vector<8x256xf32>
    %c64_208 = arith.constant 64 : index
    %c0_209 = arith.constant 0 : index
    %313 = vector.load %arg12[%c64_208, %c0_209] : memref<80x256xf32, #tpu.memory_space<vmem>>, vector<8x256xf32>
    tpu.vector_store %arg12[%c64_208, %c0_209], %312 {strides = array<i32>} : memref<80x256xf32, #tpu.memory_space<vmem>>, vector<8x256xf32>,
    %c72_210 = arith.constant 72 : index
    %c0_211 = arith.constant 0 : index
    %314 = vector.load %arg12[%c72_210, %c0_211] : memref<80x256xf32, #tpu.memory_space<vmem>>, vector<8x256xf32>
    tpu.vector_store %arg12[%c72_210, %c0_211], %166 {strides = array<i32>} : memref<80x256xf32, #tpu.memory_space<vmem>>, vector<8x256xf32>,
    %c1_212 = arith.constant 1 : index
    %c0_213 = arith.constant 0 : index
    %c0_214 = arith.constant 0 : index
    %315 = vector.load %arg4[%c1_212, %c0_213, %c0_214] : memref<2x8x80xf32, #tpu.memory_space<vmem>>, vector<1x8x80xf32>
    %316 = vector.shape_cast %315 : vector<1x8x80xf32> to vector<8x80xf32>
    %c0_215 = arith.constant 0 : index
    %c0_216 = arith.constant 0 : index
    %317 = vector.load %arg12[%c0_215, %c0_216] : memref<80x256xf32, #tpu.memory_space<vmem>>, vector<80x256xf32>
    %cst_217 = arith.constant dense<0.000000e+00> : vector<8x256xf32>
    %318 = tpu.matmul %316, %317, %cst_217 {dimension_numbers = #tpu.dot_dimension_numbers<[1], [0], [0], [1], [0, 0, 1, 1], [], []>} : vector<8x80xf32>, vector<80x256xf32>, vector<8x256xf32> -> vector<8x256xf32>
    %c1_218 = arith.constant 1 : index
    %c0_219 = arith.constant 0 : index
    %c0_220 = arith.constant 0 : index
    %319 = vector.load %arg5[%c1_218, %c0_219, %c0_220] : memref<2x8x1xf32, #tpu.memory_space<vmem>>, vector<1x8x1xf32>
    %320 = vector.shape_cast %319 : vector<1x8x1xf32> to vector<8x1xf32>
    %321 = vector.broadcast %320 : vector<8x1xf32> to vector<8x256xf32>
    %322 = arith.addf %318, %321 : vector<8x256xf32>
    %323 = arith.addf %168, %322 : vector<8x256xf32>
    %324 = vector.broadcast %210 : vector<8x1xf32> to vector<8x256xf32>
    %325 = arith.mulf %323, %324 : vector<8x256xf32>
    %c1_221 = arith.constant 1 : index
    %c0_222 = arith.constant 0 : index
    %c0_223 = arith.constant 0 : index
    %326 = vector.load %arg11[%c1_221, %c0_222, %c0_223] : memref<2x8x256xf32, #tpu.memory_space<vmem>>, vector<1x8x256xf32>
    %327 = vector.shape_cast %326 : vector<1x8x256xf32> to vector<8x256xf32>
    %328 = vector.shape_cast %325 : vector<8x256xf32> to vector<1x8x256xf32>
    tpu.vector_store %arg11[%c1_221, %c0_222, %c0_223], %328 {strides = array<i32>} : memref<2x8x256xf32, #tpu.memory_space<vmem>>, vector<1x8x256xf32>,
    return
  }
  func.func @transform_0(%arg0: i32) -> (i32, i32, i32) {
    %c0_i32 = arith.constant 0 : i32
    %c0_i32_0 = arith.constant 0 : i32
    %c0_i32_1 = arith.constant 0 : i32
    return %arg0, %c0_i32, %c0_i32_0 : i32, i32, i32
  }
  func.func @transform_1(%arg0: i32) -> (i32, i32, i32) {
    %c0_i32 = arith.constant 0 : i32
    %c0_i32_0 = arith.constant 0 : i32
    %c0_i32_1 = arith.constant 0 : i32
    return %arg0, %c0_i32, %c0_i32_0 : i32, i32, i32
  }
  func.func @transform_2(%arg0: i32) -> (i32, i32) {
    %c0_i32 = arith.constant 0 : i32
    %c0_i32_0 = arith.constant 0 : i32
    %c0_i32_1 = arith.constant 0 : i32
    return %c0_i32, %c0_i32_0 : i32, i32
  }
  func.func @transform_3(%arg0: i32) -> (i32, i32, i32) {
    %c0_i32 = arith.constant 0 : i32
    %c0_i32_0 = arith.constant 0 : i32
    %c0_i32_1 = arith.constant 0 : i32
    %c0_i32_2 = arith.constant 0 : i32
    return %c0_i32, %c0_i32_0, %c0_i32_1 : i32, i32, i32
  }
  func.func @transform_4(%arg0: i32) -> (i32, i32, i32) {
    %c0_i32 = arith.constant 0 : i32
    %c0_i32_0 = arith.constant 0 : i32
    %c0_i32_1 = arith.constant 0 : i32
    %c0_i32_2 = arith.constant 0 : i32
    return %c0_i32, %c0_i32_0, %c0_i32_1 : i32, i32, i32
  }
  func.func @transform_5(%arg0: i32) -> (i32, i32, i32) {
    %c0_i32 = arith.constant 0 : i32
    %c0_i32_0 = arith.constant 0 : i32
    %c0_i32_1 = arith.constant 0 : i32
    %c0_i32_2 = arith.constant 0 : i32
    return %c0_i32, %c0_i32_0, %c0_i32_1 : i32, i32, i32
  }
  func.func @transform_6(%arg0: i32) -> (i32, i32, i32) {
    %c0_i32 = arith.constant 0 : i32
    %c0_i32_0 = arith.constant 0 : i32
    %c0_i32_1 = arith.constant 0 : i32
    %c0_i32_2 = arith.constant 0 : i32
    return %c0_i32, %c0_i32_0, %c0_i32_1 : i32, i32, i32
  }
  func.func @transform_7(%arg0: i32) -> (i32, i32, i32) {
    %c0_i32 = arith.constant 0 : i32
    %c0_i32_0 = arith.constant 0 : i32
    %c0_i32_1 = arith.constant 0 : i32
    %c0_i32_2 = arith.constant 0 : i32
    return %c0_i32, %c0_i32_0, %c0_i32_1 : i32, i32, i32
  }
  func.func @transform_8(%arg0: i32) -> (i32, i32, i32) {
    %c0_i32 = arith.constant 0 : i32
    %c0_i32_0 = arith.constant 0 : i32
    %c0_i32_1 = arith.constant 0 : i32
    %c0_i32_2 = arith.constant 0 : i32
    return %c0_i32, %c0_i32_0, %c0_i32_1 : i32, i32, i32
  }
  func.func @transform_9(%arg0: i32) -> (i32, i32, i32) {
    %c0_i32 = arith.constant 0 : i32
    %c0_i32_0 = arith.constant 0 : i32
    %c0_i32_1 = arith.constant 0 : i32
    return %arg0, %c0_i32, %c0_i32_0 : i32, i32, i32
  }
  func.func @transform_10(%arg0: i32) -> (i32, i32, i32) {
    %c0_i32 = arith.constant 0 : i32
    %c0_i32_0 = arith.constant 0 : i32
    %c0_i32_1 = arith.constant 0 : i32
    return %arg0, %c0_i32, %c0_i32_0 : i32, i32, i32
  }
}

</mosaic_0001>

<llo_original>
// kernel: cas_forward.1
$region0: #{cas_forward.1}
  #allocation0 [shape = 'u32[]', space=smem, size = 0x4, offset = 0x4, fixed_abs, tag = 'smem constant byte address 0x4 - core index']
  #allocation1 [shape = 'u32[144,128]{1,0:T(1,128)}', space=vmem, size = 0x12000, scoped, tag = 'internal scratch']
  #allocation2 [shape = 'f32[80,256]{1,0:T(8,128)}', space=vmem, size = 0x14000, scoped, tag = 'scratch operand']
  %s0 = inlined_call_operand.vmem [shape: f32[2,8,256], index: 0, kind: input, shape index: {}]
  %s1 = inlined_call_operand.vmem [shape: f32[2,8,256], index: 1, kind: input, shape index: {}]
  %s2 = inlined_call_operand.vmem [shape: f32[9,256], index: 2, kind: input, shape index: {}]
  %s3 = inlined_call_operand.vmem [shape: f32[2,8,80], index: 3, kind: input, shape index: {}]
  %s4 = inlined_call_operand.vmem [shape: f32[2,8,1], index: 4, kind: input, shape index: {}]
  %s5 = inlined_call_operand.vmem [shape: f32[2,4,8], index: 5, kind: input, shape index: {}]
  %s6 = inlined_call_operand.vmem [shape: f32[2,4,1], index: 6, kind: input, shape index: {}]
  %s7 = inlined_call_operand.vmem [shape: f32[2,8,4], index: 7, kind: input, shape index: {}]
  %s8 = inlined_call_operand.vmem [shape: f32[2,8,1], index: 8, kind: input, shape index: {}]
  %s9 = inlined_call_operand.vmem [shape: f32[2,8,256], index: 9, kind: output, shape index: {0}]
  %s10 = inlined_call_operand.vmem [shape: f32[2,8,256], index: 10, kind: output, shape index: {1}]
  %11 = xla_tuple %s9, %s10
  %s12 = sld [smem:[#allocation0]]
  $region54: #{cas_forward.1} parent=0
    _
  %s14 = ssub.s32 1, %s12
  %s15 = scalar_select 0, %s14, %s12
  // Predicated region
  $region2: #{cas_forward.1} parent=0 // pred_check
    _
  $region3: #{cas_forward.1} parent=0 // pred_check_branch
    %17 = sbr.rel (0) target = $region5
  $region4: #{cas_forward.1} parent=0 // pred_region
    _
  $region5: #{cas_forward.1} parent=0 // pred_fallthru
    _
  // Predicated region
  $region6: #{cas_forward.1} parent=0 // pred_check
    _
  $region7: #{cas_forward.1} parent=0 // pred_check_branch
    %19 = sbr.rel (0) target = $region9
  $region8: #{cas_forward.1} parent=0 // pred_region
    _
  $region9: #{cas_forward.1} parent=0 // pred_fallthru
    _
  // Predicated region
  $region10: #{cas_forward.1} parent=0 // pred_check
    _
  $region11: #{cas_forward.1} parent=0 // pred_check_branch
    %21 = sbr.rel (0) target = $region13
  $region12: #{cas_forward.1} parent=0 // pred_region
    _
  $region13: #{cas_forward.1} parent=0 // pred_fallthru
    _
  // Predicated region
  $region14: #{cas_forward.1} parent=0 // pred_check
    _
  $region15: #{cas_forward.1} parent=0 // pred_check_branch
    %23 = sbr.rel (0) target = $region17
  $region16: #{cas_forward.1} parent=0 // pred_region
    _
  $region17: #{cas_forward.1} parent=0 // pred_fallthru
    _
  // Predicated region
  $region18: #{cas_forward.1} parent=0 // pred_check
    _
  $region19: #{cas_forward.1} parent=0 // pred_check_branch
    %25 = sbr.rel (0) target = $region21
  $region20: #{cas_forward.1} parent=0 // pred_region
    _
  $region21: #{cas_forward.1} parent=0 // pred_fallthru
    _
  // Predicated region
  $region22: #{cas_forward.1} parent=0 // pred_check
    _
  $region23: #{cas_forward.1} parent=0 // pred_check_branch
    %27 = sbr.rel (0) target = $region25
  $region24: #{cas_forward.1} parent=0 // pred_region
    _
  $region25: #{cas_forward.1} parent=0 // pred_fallthru
    _
  // Predicated region
  $region26: #{cas_forward.1} parent=0 // pred_check
    _
  $region27: #{cas_forward.1} parent=0 // pred_check_branch
    %29 = sbr.rel (0) target = $region29
  $region28: #{cas_forward.1} parent=0 // pred_region
    _
  $region29: #{cas_forward.1} parent=0 // pred_fallthru
    _
  // Predicated region
  $region30: #{cas_forward.1} parent=0 // pred_check
    _
  $region31: #{cas_forward.1} parent=0 // pred_check_branch
    %31 = sbr.rel (0) target = $region33
  $region32: #{cas_forward.1} parent=0 // pred_region
    _
  $region33: #{cas_forward.1} parent=0 // pred_fallthru
    _
  // Predicated region
  $region34: #{cas_forward.1} parent=0 // pred_check
    _
  $region35: #{cas_forward.1} parent=0 // pred_check_branch
    %33 = sbr.rel (0) target = $region37
  $region36: #{cas_forward.1} parent=0 // pred_region
    _
  $region37: #{cas_forward.1} parent=0 // pred_fallthru
    _
  %v34 = vld [vmem:[%s2] sm:$0xff]
  %v35 = vld [vmem:[%s2 + $0x8] sm:$0xff]
  %v36 = vld [vmem:[%s2 + $0x10] sm:$0x1]
  %v37 = vld [vmem:[%s2 + $0x18] sm:$0x1]
  %v38 = vld [vmem:[%s0] sm:$0xff]
  %v39 = vld [vmem:[%s0 + $0x8] sm:$0xff]
  %v40 = vld [vmem:[%s1] sm:$0xff]
  %v41 = vld [vmem:[%s1 + $0x8] sm:$0xff]
  %v42 = vadd.f32 %v38, %v39
  %43 = vadd.xlane.f32.xlu0 %v42
  %v44 = vpop.xlane.xlu0 %43
  %v45 = vrcp.pop 256.0
  %v46 = vmul.f32 %v44, %v45
  %v47 = vld [vmem:[%s5] sm:$0xf]
  %v48 = vld [vmem:[%s6] sm:$0xf]
  %vm49 = vcmask 64512
  %v51 = vsel %vm49, %v47, 0
  %53 = vmatprep.subr.mxu0 0.0
  %54 = vmatpush1.msra.mxu0 %v46
  %55 = vmatprep.subr.mxu0 0.0
  %56 = vmatpush1.msra.mxu0 0.0
  %57 = vmatprep.subr.mxu0 0.0
  %58 = vmatpush1.msra.mxu0 0.0
  %59 = vmatprep.subr.mxu0 0.0
  %60 = vmatpush1.msra.mxu0 0.0
  %61 = vmatprep.subr.mxu0 0.0
  %62 = vmatpush1.msra.mxu0 0.0
  %63 = vmatprep.subr.mxu0 0.0
  %64 = vmatpush1.msra.mxu0 0.0
  %65 = vmatprep.subr.mxu0 0.0
  %66 = vmatpush1.msra.mxu0 0.0
  %67 = vmatprep.subr.mxu0 0.0
  %68 = vmatpush1.msra.mxu0 0.0
  %69 = vmatprep.subr.mxu0 0.0
  %70 = vmatpush1.msra.mxu0 0.0
  %71 = vmatprep.subr.mxu0 0.0
  %72 = vmatpush1.msra.mxu0 0.0
  %73 = vmatprep.subr.mxu0 0.0
  %74 = vmatpush1.msra.mxu0 0.0
  %75 = vmatprep.subr.mxu0 0.0
  %76 = vmatpush1.msra.mxu0 0.0
  %77 = vmatprep.subr.mxu0 0.0
  %78 = vmatpush1.msra.mxu0 0.0
  %79 = vmatprep.subr.mxu0 0.0
  %80 = vmatpush1.msra.mxu0 0.0
  %81 = vmatprep.subr.mxu0 0.0
  %82 = vmatpush1.msra.mxu0 0.0
  %83 = vmatprep.subr.mxu0 0.0
  %84 = vmatpush1.msra.mxu0 0.0
  %85 = vmatprep.subr.mxu0 0.0
  %86 = vmatpush1.msra.mxu0 0.0
  %87 = vmatprep.subr.mxu0 0.0
  %88 = vmatpush1.msra.mxu0 0.0
  %89 = vmatprep.subr.mxu0 0.0
  %90 = vmatpush1.msra.mxu0 0.0
  %91 = vmatprep.subr.mxu0 0.0
  %92 = vmatpush1.msra.mxu0 0.0
  %93 = vmatprep.subr.mxu0 0.0
  %94 = vmatpush1.msra.mxu0 0.0
  %95 = vmatprep.subr.mxu0 0.0
  %96 = vmatpush1.msra.mxu0 0.0
  %97 = vmatprep.subr.mxu0 0.0
  %98 = vmatpush1.msra.mxu0 0.0
  %99 = vmatprep.subr.mxu0 0.0
  %100 = vmatpush1.msra.mxu0 0.0
  %101 = vmatprep.subr.mxu0 0.0
  %102 = vmatpush1.msra.mxu0 0.0
  %103 = vmatprep.subr.mxu0 0.0
  %104 = vmatpush1.msra.mxu0 0.0
  %105 = vmatprep.subr.mxu0 0.0
  %106 = vmatpush1.msra.mxu0 0.0
  %107 = vmatprep.subr.mxu0 0.0
  %108 = vmatpush1.msra.mxu0 0.0
  %109 = vmatprep.subr.mxu0 0.0
  %110 = vmatpush1.msra.mxu0 0.0
  %111 = vmatprep.subr.mxu0 0.0
  %112 = vmatpush1.msra.mxu0 0.0
  %113 = vmatprep.subr.mxu0 0.0
  %114 = vmatpush1.msra.mxu0 0.0
  %115 = vmatprep.subr.mxu0 0.0
  %116 = vmatpush1.msra.mxu0 0.0
  %117 = vmatprep.mubr.f32.mxu0 0.0
  %118 = vmatmul.mubr.f32.gmra.mrb[0].mxu0 %v51
  %v119 = vpop.f32.mrb[0].mxu0
  %v120 = vadd.f32 %v48, %v119
  %v121 = vpop.f32.mrb[0].mxu0
  %122 = vdwg.mxu0
  %v123 = vmax.f32 %v120, 0.0
  %v124 = vld [vmem:[%s7] sm:$0xff]
  %v125 = vld [vmem:[%s8] sm:$0xff]
  %vm126 = vcmask 31744
  %v128 = vsel %vm126, %v124, 0
  %vm130 = vcmask 1043456
  %v132 = vsel %vm130, %v123, 0
  %134 = vmatprep.subr.mxu0 0.0
  %135 = vmatpush1.msra.mxu0 %v132
  %136 = vmatprep.subr.mxu0 0.0
  %137 = vmatpush1.msra.mxu0 0.0
  %138 = vmatprep.subr.mxu0 0.0
  %139 = vmatpush1.msra.mxu0 0.0
  %140 = vmatprep.subr.mxu0 0.0
  %141 = vmatpush1.msra.mxu0 0.0
  %142 = vmatprep.subr.mxu0 0.0
  %143 = vmatpush1.msra.mxu0 0.0
  %144 = vmatprep.subr.mxu0 0.0
  %145 = vmatpush1.msra.mxu0 0.0
  %146 = vmatprep.subr.mxu0 0.0
  %147 = vmatpush1.msra.mxu0 0.0
  %148 = vmatprep.subr.mxu0 0.0
  %149 = vmatpush1.msra.mxu0 0.0
  %150 = vmatprep.subr.mxu0 0.0
  %151 = vmatpush1.msra.mxu0 0.0
  %152 = vmatprep.subr.mxu0 0.0
  %153 = vmatpush1.msra.mxu0 0.0
  %154 = vmatprep.subr.mxu0 0.0
  %155 = vmatpush1.msra.mxu0 0.0
  %156 = vmatprep.subr.mxu0 0.0
  %157 = vmatpush1.msra.mxu0 0.0
  %158 = vmatprep.subr.mxu0 0.0
  %159 = vmatpush1.msra.mxu0 0.0
  %160 = vmatprep.subr.mxu0 0.0
  %161 = vmatpush1.msra.mxu0 0.0
  %162 = vmatprep.subr.mxu0 0.0
  %163 = vmatpush1.msra.mxu0 0.0
  %164 = vmatprep.subr.mxu0 0.0
  %165 = vmatpush1.msra.mxu0 0.0
  %166 = vmatprep.subr.mxu0 0.0
  %167 = vmatpush1.msra.mxu0 0.0
  %168 = vmatprep.subr.mxu0 0.0
  %169 = vmatpush1.msra.mxu0 0.0
  %170 = vmatprep.subr.mxu0 0.0
  %171 = vmatpush1.msra.mxu0 0.0
  %172 = vmatprep.subr.mxu0 0.0
  %173 = vmatpush1.msra.mxu0 0.0
  %174 = vmatprep.subr.mxu0 0.0
  %175 = vmatpush1.msra.mxu0 0.0
  %176 = vmatprep.subr.mxu0 0.0
  %177 = vmatpush1.msra.mxu0 0.0
  %178 = vmatprep.subr.mxu0 0.0
  %179 = vmatpush1.msra.mxu0 0.0
  %180 = vmatprep.subr.mxu0 0.0
  %181 = vmatpush1.msra.mxu0 0.0
  %182 = vmatprep.subr.mxu0 0.0
  %183 = vmatpush1.msra.mxu0 0.0
  %184 = vmatprep.subr.mxu0 0.0
  %185 = vmatpush1.msra.mxu0 0.0
  %186 = vmatprep.subr.mxu0 0.0
  %187 = vmatpush1.msra.mxu0 0.0
  %188 = vmatprep.subr.mxu0 0.0
  %189 = vmatpush1.msra.mxu0 0.0
  %190 = vmatprep.subr.mxu0 0.0
  %191 = vmatpush1.msra.mxu0 0.0
  %192 = vmatprep.subr.mxu0 0.0
  %193 = vmatpush1.msra.mxu0 0.0
  %194 = vmatprep.subr.mxu0 0.0
  %195 = vmatpush1.msra.mxu0 0.0
  %196 = vmatprep.subr.mxu0 0.0
  %197 = vmatpush1.msra.mxu0 0.0
  %198 = vmatprep.mubr.f32.mxu0 0.0
  %199 = vmatmul.mubr.f32.gmra.mrb[0].mxu0 %v128
  %v200 = vpop.f32.mrb[0].mxu0
  %v201 = vadd.f32 %v125, %v200
  %v202 = vpop.f32.mrb[0].mxu0
  %203 = vdwg.mxu0
  %v204 = vadd.f32 %v40, %v41
  %205 = vadd.xlane.f32.xlu0 %v204
  %v206 = vpop.xlane.xlu0 %205
  %v207 = vmul.f32 %v206, %v45
  %s208 = scalar_lea.vmem %s5, 4
  %v209 = vld [vmem:[%s208] sm:$0xf]
  %s210 = scalar_lea.vmem %s6, 4
  %v211 = vld [vmem:[%s210] sm:$0xf]
  %v213 = vsel %vm49, %v209, 0
  %215 = vmatprep.subr.mxu0 0.0
  %216 = vmatpush1.msra.mxu0 %v207
  %217 = vmatprep.subr.mxu0 0.0
  %218 = vmatpush1.msra.mxu0 0.0
  %219 = vmatprep.subr.mxu0 0.0
  %220 = vmatpush1.msra.mxu0 0.0
  %221 = vmatprep.subr.mxu0 0.0
  %222 = vmatpush1.msra.mxu0 0.0
  %223 = vmatprep.subr.mxu0 0.0
  %224 = vmatpush1.msra.mxu0 0.0
  %225 = vmatprep.subr.mxu0 0.0
  %226 = vmatpush1.msra.mxu0 0.0
  %227 = vmatprep.subr.mxu0 0.0
  %228 = vmatpush1.msra.mxu0 0.0
  %229 = vmatprep.subr.mxu0 0.0
  %230 = vmatpush1.msra.mxu0 0.0
  %231 = vmatprep.subr.mxu0 0.0
  %232 = vmatpush1.msra.mxu0 0.0
  %233 = vmatprep.subr.mxu0 0.0
  %234 = vmatpush1.msra.mxu0 0.0
  %235 = vmatprep.subr.mxu0 0.0
  %236 = vmatpush1.msra.mxu0 0.0
  %237 = vmatprep.subr.mxu0 0.0
  %238 = vmatpush1.msra.mxu0 0.0
  %239 = vmatprep.subr.mxu0 0.0
  %240 = vmatpush1.msra.mxu0 0.0
  %241 = vmatprep.subr.mxu0 0.0
  %242 = vmatpush1.msra.mxu0 0.0
  %243 = vmatprep.subr.mxu0 0.0
  %244 = vmatpush1.msra.mxu0 0.0
  %245 = vmatprep.subr.mxu0 0.0
  %246 = vmatpush1.msra.mxu0 0.0
  %247 = vmatprep.subr.mxu0 0.0
  %248 = vmatpush1.msra.mxu0 0.0
  %249 = vmatprep.subr.mxu0 0.0
  %250 = vmatpush1.msra.mxu0 0.0
  %251 = vmatprep.subr.mxu0 0.0
  %252 = vmatpush1.msra.mxu0 0.0
  %253 = vmatprep.subr.mxu0 0.0
  %254 = vmatpush1.msra.mxu0 0.0
  %255 = vmatprep.subr.mxu0 0.0
  %256 = vmatpush1.msra.mxu0 0.0
  %257 = vmatprep.subr.mxu0 0.0
  %258 = vmatpush1.msra.mxu0 0.0
  %259 = vmatprep.subr.mxu0 0.0
  %260 = vmatpush1.msra.mxu0 0.0
  %261 = vmatprep.subr.mxu0 0.0
  %262 = vmatpush1.msra.mxu0 0.0
  %263 = vmatprep.subr.mxu0 0.0
  %264 = vmatpush1.msra.mxu0 0.0
  %265 = vmatprep.subr.mxu0 0.0
  %266 = vmatpush1.msra.mxu0 0.0
  %267 = vmatprep.subr.mxu0 0.0
  %268 = vmatpush1.msra.mxu0 0.0
  %269 = vmatprep.subr.mxu0 0.0
  %270 = vmatpush1.msra.mxu0 0.0
  %271 = vmatprep.subr.mxu0 0.0
  %272 = vmatpush1.msra.mxu0 0.0
  %273 = vmatprep.subr.mxu0 0.0
  %274 = vmatpush1.msra.mxu0 0.0
  %275 = vmatprep.subr.mxu0 0.0
  %276 = vmatpush1.msra.mxu0 0.0
  %277 = vmatprep.subr.mxu0 0.0
  %278 = vmatpush1.msra.mxu0 0.0
  %279 = vmatprep.mubr.f32.mxu0 0.0
  %280 = vmatmul.mubr.f32.gmra.mrb[0].mxu0 %v213
  %v281 = vpop.f32.mrb[0].mxu0
  %v282 = vadd.f32 %v211, %v281
  %v283 = vpop.f32.mrb[0].mxu0
  %284 = vdwg.mxu0
  %v285 = vmax.f32 %v282, 0.0
  %s286 = scalar_lea.vmem %s7, 8
  %v287 = vld [vmem:[%s286] sm:$0xff]
  %s288 = scalar_lea.vmem %s8, 8
  %v289 = vld [vmem:[%s288] sm:$0xff]
  %v291 = vsel %vm126, %v287, 0
  %v294 = vsel %vm130, %v285, 0
  %296 = vmatprep.subr.mxu0 0.0
  %297 = vmatpush1.msra.mxu0 %v294
  %298 = vmatprep.subr.mxu0 0.0
  %299 = vmatpush1.msra.mxu0 0.0
  %300 = vmatprep.subr.mxu0 0.0
  %301 = vmatpush1.msra.mxu0 0.0
  %302 = vmatprep.subr.mxu0 0.0
  %303 = vmatpush1.msra.mxu0 0.0
  %304 = vmatprep.subr.mxu0 0.0
  %305 = vmatpush1.msra.mxu0 0.0
  %306 = vmatprep.subr.mxu0 0.0
  %307 = vmatpush1.msra.mxu0 0.0
  %308 = vmatprep.subr.mxu0 0.0
  %309 = vmatpush1.msra.mxu0 0.0
  %310 = vmatprep.subr.mxu0 0.0
  %311 = vmatpush1.msra.mxu0 0.0
  %312 = vmatprep.subr.mxu0 0.0
  %313 = vmatpush1.msra.mxu0 0.0
  %314 = vmatprep.subr.mxu0 0.0
  %315 = vmatpush1.msra.mxu0 0.0
  %316 = vmatprep.subr.mxu0 0.0
  %317 = vmatpush1.msra.mxu0 0.0
  %318 = vmatprep.subr.mxu0 0.0
  %319 = vmatpush1.msra.mxu0 0.0
  %320 = vmatprep.subr.mxu0 0.0
  %321 = vmatpush1.msra.mxu0 0.0
  %322 = vmatprep.subr.mxu0 0.0
  %323 = vmatpush1.msra.mxu0 0.0
  %324 = vmatprep.subr.mxu0 0.0
  %325 = vmatpush1.msra.mxu0 0.0
  %326 = vmatprep.subr.mxu0 0.0
  %327 = vmatpush1.msra.mxu0 0.0
  %328 = vmatprep.subr.mxu0 0.0
  %329 = vmatpush1.msra.mxu0 0.0
  %330 = vmatprep.subr.mxu0 0.0
  %331 = vmatpush1.msra.mxu0 0.0
  %332 = vmatprep.subr.mxu0 0.0
  %333 = vmatpush1.msra.mxu0 0.0
  %334 = vmatprep.subr.mxu0 0.0
  %335 = vmatpush1.msra.mxu0 0.0
  %336 = vmatprep.subr.mxu0 0.0
  %337 = vmatpush1.msra.mxu0 0.0
  %338 = vmatprep.subr.mxu0 0.0
  %339 = vmatpush1.msra.mxu0 0.0
  %340 = vmatprep.subr.mxu0 0.0
  %341 = vmatpush1.msra.mxu0 0.0
  %342 = vmatprep.subr.mxu0 0.0
  %343 = vmatpush1.msra.mxu0 0.0
  %344 = vmatprep.subr.mxu0 0.0
  %345 = vmatpush1.msra.mxu0 0.0
  %346 = vmatprep.subr.mxu0 0.0
  %347 = vmatpush1.msra.mxu0 0.0
  %348 = vmatprep.subr.mxu0 0.0
  %349 = vmatpush1.msra.mxu0 0.0
  %350 = vmatprep.subr.mxu0 0.0
  %351 = vmatpush1.msra.mxu0 0.0
  %352 = vmatprep.subr.mxu0 0.0
  %353 = vmatpush1.msra.mxu0 0.0
  %354 = vmatprep.subr.mxu0 0.0
  %355 = vmatpush1.msra.mxu0 0.0
  %356 = vmatprep.subr.mxu0 0.0
  %357 = vmatpush1.msra.mxu0 0.0
  %358 = vmatprep.subr.mxu0 0.0
  %359 = vmatpush1.msra.mxu0 0.0
  %360 = vmatprep.mubr.f32.mxu0 0.0
  %361 = vmatmul.mubr.f32.gmra.mrb[0].mxu0 %v291
  %v362 = vpop.f32.mrb[0].mxu0
  %v363 = vadd.f32 %v289, %v362
  %v364 = vpop.f32.mrb[0].mxu0
  %365 = vdwg.mxu0
  %v366 = vadd.f32 %v201, %v363
  %v367 = vxor.u32 %v366, 2147483648
  %v368 = vmul.f32 %v367, 1.442695
  %v369 = vpow.pop %v368
  %v370 = vadd.f32 %v369, 1.0
  %v371 = vrcp.pop %v370
  %v372 = vmul.f32 1.0, %v371
  %373 = vrot.lane.b32.xlu0 %v38, 17
  %v374 = vpop.permute.xlu0 %373
  %375 = vrot.lane.b32.xlu0 %v39, 17
  %v376 = vpop.permute.xlu0 %375
  %v377 = vlaneseq
  %v378 = vand.u32 %v377, 127
  %vm379 = vcmp.lt.s32.totalorder %v378, 17
  %v380 = vsel %vm379, %v374, %v376
  %v381 = vsel %vm379, %v376, %v374
  %v382 = vlaneseq
  %v383 = vshrl.u32 %v382, 7
  %v384 = vsub.s32 0, %v383
  %v385 = vrot.slane %v34, %v384
  %v386 = vlaneseq
  %v387 = vshrl.u32 %v386, 7
  %v388 = vsub.s32 0, %v387
  %v389 = vrot.slane %v35, %v388
  %v390 = vmul.f32 %v381, %v385
  %v391 = vmul.f32 %v380, %v389
  %392 = vst [vmem:[#allocation2] sm:$0xff] %v390
  %393 = vst [vmem:[#allocation2 + $0x8] sm:$0xff] %v391
  %394 = vrot.lane.b32.xlu0 %v38, 16
  %v395 = vpop.permute.xlu0 %394
  %396 = vrot.lane.b32.xlu0 %v39, 16
  %v397 = vpop.permute.xlu0 %396
  %vm398 = vcmp.lt.s32.totalorder %v378, 16
  %v399 = vsel %vm398, %v395, %v397
  %v400 = vsel %vm398, %v397, %v395
  %v401 = vlaneseq
  %v402 = vshrl.u32 %v401, 7
  %v403 = vsub.s32 1, %v402
  %v404 = vrot.slane %v34, %v403
  %v405 = vlaneseq
  %v406 = vshrl.u32 %v405, 7
  %v407 = vsub.s32 1, %v406
  %v408 = vrot.slane %v35, %v407
  %v409 = vmul.f32 %v400, %v404
  %v410 = vmul.f32 %v399, %v408
  %411 = vst [vmem:[#allocation2 + $0x10] sm:$0xff] %v409
  %412 = vst [vmem:[#allocation2 + $0x18] sm:$0xff] %v410
  %413 = vrot.lane.b32.xlu0 %v38, 15
  %v414 = vpop.permute.xlu0 %413
  %415 = vrot.lane.b32.xlu0 %v39, 15
  %v416 = vpop.permute.xlu0 %415
  %vm417 = vcmp.lt.s32.totalorder %v378, 15
  %v418 = vsel %vm417, %v414, %v416
  %v419 = vsel %vm417, %v416, %v414
  %v420 = vlaneseq
  %v421 = vshrl.u32 %v420, 7
  %v422 = vsub.s32 2, %v421
  %v423 = vrot.slane %v34, %v422
  %v424 = vlaneseq
  %v425 = vshrl.u32 %v424, 7
  %v426 = vsub.s32 2, %v425
  %v427 = vrot.slane %v35, %v426
  %v428 = vmul.f32 %v419, %v423
  %v429 = vmul.f32 %v418, %v427
  %430 = vst [vmem:[#allocation2 + $0x20] sm:$0xff] %v428
  %431 = vst [vmem:[#allocation2 + $0x28] sm:$0xff] %v429
  %432 = vrot.lane.b32.xlu0 %v38, 1
  %v433 = vpop.permute.xlu0 %432
  %434 = vrot.lane.b32.xlu0 %v39, 1
  %v435 = vpop.permute.xlu0 %434
  %vm436 = vcmp.lt.s32.totalorder %v378, 1
  %v437 = vsel %vm436, %v433, %v435
  %v438 = vsel %vm436, %v435, %v433
  %v439 = vlaneseq
  %v440 = vshrl.u32 %v439, 7
  %v441 = vsub.s32 3, %v440
  %v442 = vrot.slane %v34, %v441
  %v443 = vlaneseq
  %v444 = vshrl.u32 %v443, 7
  %v445 = vsub.s32 3, %v444
  %v446 = vrot.slane %v35, %v445
  %v447 = vmul.f32 %v438, %v442
  %v448 = vmul.f32 %v437, %v446
  %449 = vst [vmem:[#allocation2 + $0x30] sm:$0xff] %v447
  %450 = vst [vmem:[#allocation2 + $0x38] sm:$0xff] %v448
  %v451 = vlaneseq
  %v452 = vshrl.u32 %v451, 7
  %v453 = vsub.s32 4, %v452
  %v454 = vrot.slane %v34, %v453
  %v455 = vlaneseq
  %v456 = vshrl.u32 %v455, 7
  %v457 = vsub.s32 4, %v456
  %v458 = vrot.slane %v35, %v457
  %v459 = vmul.f32 %v38, %v454
  %v460 = vmul.f32 %v39, %v458
  %461 = vst [vmem:[#allocation2 + $0x40] sm:$0xff] %v459
  %462 = vst [vmem:[#allocation2 + $0x48] sm:$0xff] %v460
  %463 = vrot.lane.b32.xlu0 %v38, 127
  %v464 = vpop.permute.xlu0 %463
  %465 = vrot.lane.b32.xlu0 %v39, 127
  %v466 = vpop.permute.xlu0 %465
  %vm467 = vcmp.lt.s32.totalorder %v378, 127
  %v468 = vsel %vm467, %v464, %v466
  %v469 = vsel %vm467, %v466, %v464
  %v470 = vlaneseq
  %v471 = vshrl.u32 %v470, 7
  %v472 = vsub.s32 5, %v471
  %v473 = vrot.slane %v34, %v472
  %v474 = vlaneseq
  %v475 = vshrl.u32 %v474, 7
  %v476 = vsub.s32 5, %v475
  %v477 = vrot.slane %v35, %v476
  %v478 = vmul.f32 %v468, %v473
  %v479 = vmul.f32 %v469, %v477
  %480 = vst [vmem:[#allocation2 + $0x50] sm:$0xff] %v478
  %481 = vst [vmem:[#allocation2 + $0x58] sm:$0xff] %v479
  %482 = vrot.lane.b32.xlu0 %v38, 113
  %v483 = vpop.permute.xlu0 %482
  %484 = vrot.lane.b32.xlu0 %v39, 113
  %v485 = vpop.permute.xlu0 %484
  %vm486 = vcmp.lt.s32.totalorder %v378, 113
  %v487 = vsel %vm486, %v483, %v485
  %v488 = vsel %vm486, %v485, %v483
  %v489 = vlaneseq
  %v490 = vshrl.u32 %v489, 7
  %v491 = vsub.s32 6, %v490
  %v492 = vrot.slane %v34, %v491
  %v493 = vlaneseq
  %v494 = vshrl.u32 %v493, 7
  %v495 = vsub.s32 6, %v494
  %v496 = vrot.slane %v35, %v495
  %v497 = vmul.f32 %v487, %v492
  %v498 = vmul.f32 %v488, %v496
  %499 = vst [vmem:[#allocation2 + $0x60] sm:$0xff] %v497
  %500 = vst [vmem:[#allocation2 + $0x68] sm:$0xff] %v498
  %501 = vrot.lane.b32.xlu0 %v38, 112
  %v502 = vpop.permute.xlu0 %501
  %503 = vrot.lane.b32.xlu0 %v39, 112
  %v504 = vpop.permute.xlu0 %503
  %vm505 = vcmp.lt.s32.totalorder %v378, 112
  %v506 = vsel %vm505, %v502, %v504
  %v507 = vsel %vm505, %v504, %v502
  %v508 = vlaneseq
  %v509 = vshrl.u32 %v508, 7
  %v510 = vsub.s32 7, %v509
  %v511 = vrot.slane %v34, %v510
  %v512 = vlaneseq
  %v513 = vshrl.u32 %v512, 7
  %v514 = vsub.s32 7, %v513
  %v515 = vrot.slane %v35, %v514
  %v516 = vmul.f32 %v506, %v511
  %v517 = vmul.f32 %v507, %v515
  %518 = vst [vmem:[#allocation2 + $0x70] sm:$0xff] %v516
  %519 = vst [vmem:[#allocation2 + $0x78] sm:$0xff] %v517
  %520 = vrot.lane.b32.xlu0 %v38, 111
  %v521 = vpop.permute.xlu0 %520
  %522 = vrot.lane.b32.xlu0 %v39, 111
  %v523 = vpop.permute.xlu0 %522
  %vm524 = vcmp.lt.s32.totalorder %v378, 111
  %v525 = vsel %vm524, %v521, %v523
  %v526 = vsel %vm524, %v523, %v521
  %v527 = vlaneseq
  %v528 = vshrl.u32 %v527, 7
  %v529 = vsub.s32 0, %v528
  %v530 = vrot.slane %v36, %v529
  %v531 = vlaneseq
  %v532 = vshrl.u32 %v531, 7
  %v533 = vsub.s32 0, %v532
  %v534 = vrot.slane %v37, %v533
  %v535 = vmul.f32 %v525, %v530
  %v536 = vmul.f32 %v526, %v534
  %537 = vst [vmem:[#allocation2 + $0x80] sm:$0xff] %v535
  %538 = vst [vmem:[#allocation2 + $0x88] sm:$0xff] %v536
  %539 = vst [vmem:[#allocation2 + $0x90] sm:$0xff] %v40
  %540 = vst [vmem:[#allocation2 + $0x98] sm:$0xff] %v41
  %v541 = vld [vmem:[%s3] sm:$0xff]
  %v542 = vld [vmem:[#allocation2] sm:$0xff]
  %v543 = vld [vmem:[#allocation2 + $0x8] sm:$0xff]
  %v544 = vld [vmem:[#allocation2 + $0x10] sm:$0xff]
  %v545 = vld [vmem:[#allocation2 + $0x18] sm:$0xff]
  %v546 = vld [vmem:[#allocation2 + $0x20] sm:$0xff]
  %v547 = vld [vmem:[#allocation2 + $0x28] sm:$0xff]
  %v548 = vld [vmem:[#allocation2 + $0x30] sm:$0xff]
  %v549 = vld [vmem:[#allocation2 + $0x38] sm:$0xff]
  %v550 = vld [vmem:[#allocation2 + $0x40] sm:$0xff]
  %v551 = vld [vmem:[#allocation2 + $0x48] sm:$0xff]
  %v552 = vld [vmem:[#allocation2 + $0x50] sm:$0xff]
  %v553 = vld [vmem:[#allocation2 + $0x58] sm:$0xff]
  %v554 = vld [vmem:[#allocation2 + $0x60] sm:$0xff]
  %v555 = vld [vmem:[#allocation2 + $0x68] sm:$0xff]
  %v556 = vld [vmem:[#allocation2 + $0x70] sm:$0xff]
  %v557 = vld [vmem:[#allocation2 + $0x78] sm:$0xff]
  %v558 = vld [vmem:[#allocation2 + $0x80] sm:$0xff]
  %v559 = vld [vmem:[#allocation2 + $0x88] sm:$0xff]
  %v560 = vld [vmem:[#allocation2 + $0x90] sm:$0xff]
  %v561 = vld [vmem:[#allocation2 + $0x98] sm:$0xff]
  %v562 = vld [vmem:[%s4] sm:$0xff]
  %564 = vset.pattern.permute.xlu0 0
  %565 = vperm.xlu0 %564, %v562
  %v566 = vpop.permute.xlu0 %565
  %vm568 = vcmask 654336
  %v570 = vsel %vm568, %v541, 0
  %572 = vmatprep.subr.mxu0 %v543
  %573 = vmatpush1.msra.mxu0 %v542
  %574 = vmatprep.subr.mxu0 %v545
  %575 = vmatpush1.msra.mxu0 %v544
  %576 = vmatprep.subr.mxu0 %v547
  %577 = vmatpush1.msra.mxu0 %v546
  %578 = vmatprep.subr.mxu0 %v549
  %579 = vmatpush1.msra.mxu0 %v548
  %580 = vmatprep.subr.mxu0 %v551
  %581 = vmatpush1.msra.mxu0 %v550
  %582 = vmatprep.subr.mxu0 %v553
  %583 = vmatpush1.msra.mxu0 %v552
  %584 = vmatprep.subr.mxu0 %v555
  %585 = vmatpush1.msra.mxu0 %v554
  %586 = vmatprep.subr.mxu0 %v557
  %587 = vmatpush1.msra.mxu0 %v556
  %588 = vmatprep.subr.mxu0 %v559
  %589 = vmatpush1.msra.mxu0 %v558
  %590 = vmatprep.subr.mxu0 %v561
  %591 = vmatpush1.msra.mxu0 %v560
  %592 = vmatprep.subr.mxu0 0.0
  %593 = vmatpush1.msra.mxu0 0.0
  %594 = vmatprep.subr.mxu0 0.0
  %595 = vmatpush1.msra.mxu0 0.0
  %596 = vmatprep.subr.mxu0 0.0
  %597 = vmatpush1.msra.mxu0 0.0
  %598 = vmatprep.subr.mxu0 0.0
  %599 = vmatpush1.msra.mxu0 0.0
  %600 = vmatprep.subr.mxu0 0.0
  %601 = vmatpush1.msra.mxu0 0.0
  %602 = vmatprep.subr.mxu0 0.0
  %603 = vmatpush1.msra.mxu0 0.0
  %604 = vmatprep.subr.mxu0 0.0
  %605 = vmatpush1.msra.mxu0 0.0
  %606 = vmatprep.subr.mxu0 0.0
  %607 = vmatpush1.msra.mxu0 0.0
  %608 = vmatprep.subr.mxu0 0.0
  %609 = vmatpush1.msra.mxu0 0.0
  %610 = vmatprep.subr.mxu0 0.0
  %611 = vmatpush1.msra.mxu0 0.0
  %612 = vmatprep.subr.mxu0 0.0
  %613 = vmatpush1.msra.mxu0 0.0
  %614 = vmatprep.subr.mxu0 0.0
  %615 = vmatpush1.msra.mxu0 0.0
  %616 = vmatprep.subr.mxu0 0.0
  %617 = vmatpush1.msra.mxu0 0.0
  %618 = vmatprep.subr.mxu0 0.0
  %619 = vmatpush1.msra.mxu0 0.0
  %620 = vmatprep.subr.mxu0 0.0
  %621 = vmatpush1.msra.mxu0 0.0
  %622 = vmatprep.subr.mxu0 0.0
  %623 = vmatpush1.msra.mxu0 0.0
  %624 = vmatprep.subr.mxu0 0.0
  %625 = vmatpush1.msra.mxu0 0.0
  %626 = vmatprep.subr.mxu0 0.0
  %627 = vmatpush1.msra.mxu0 0.0
  %628 = vmatprep.subr.mxu0 0.0
  %629 = vmatpush1.msra.mxu0 0.0
  %630 = vmatprep.subr.mxu0 0.0
  %631 = vmatpush1.msra.mxu0 0.0
  %632 = vmatprep.subr.mxu0 0.0
  %633 = vmatpush1.msra.mxu0 0.0
  %634 = vmatprep.subr.mxu0 0.0
  %635 = vmatpush1.msra.mxu0 0.0
  %636 = vmatprep.mubr.f32.mxu0 0.0
  %637 = vmatmul.mubr.f32.gmra.mrb[0].mxu0 %v570
  %v638 = vpop.f32.mrb[0].mxu0
  %v639 = vadd.f32 %v566, %v638
  %v640 = vpop.f32.mrb[0].mxu0
  %v641 = vadd.f32 %v566, %v640
  %642 = vdwg.mxu0
  %v643 = vadd.f32 %v38, %v639
  %v644 = vadd.f32 %v39, %v641
  %646 = vset.pattern.permute.xlu0 0
  %647 = vperm.xlu0 %646, %v372
  %v648 = vpop.permute.xlu0 %647
  %v650 = vmul.f32 %v643, %v648
  %v651 = vmul.f32 %v644, %v648
  %652 = vst [vmem:[%s9] sm:$0xff] %v650
  %653 = vst [vmem:[%s9 + $0x8] sm:$0xff] %v651
  %654 = vrot.lane.b32.xlu0 %v40, 17
  %v655 = vpop.permute.xlu0 %654
  %656 = vrot.lane.b32.xlu0 %v41, 17
  %v657 = vpop.permute.xlu0 %656
  %v658 = vsel %vm379, %v655, %v657
  %v659 = vsel %vm379, %v657, %v655
  %v660 = vmul.f32 %v659, %v385
  %v661 = vmul.f32 %v658, %v389
  %662 = vst [vmem:[#allocation2] sm:$0xff] %v660
  %663 = vst [vmem:[#allocation2 + $0x8] sm:$0xff] %v661
  %664 = vrot.lane.b32.xlu0 %v40, 16
  %v665 = vpop.permute.xlu0 %664
  %666 = vrot.lane.b32.xlu0 %v41, 16
  %v667 = vpop.permute.xlu0 %666
  %v668 = vsel %vm398, %v665, %v667
  %v669 = vsel %vm398, %v667, %v665
  %v670 = vmul.f32 %v669, %v404
  %v671 = vmul.f32 %v668, %v408
  %672 = vst [vmem:[#allocation2 + $0x10] sm:$0xff] %v670
  %673 = vst [vmem:[#allocation2 + $0x18] sm:$0xff] %v671
  %674 = vrot.lane.b32.xlu0 %v40, 15
  %v675 = vpop.permute.xlu0 %674
  %676 = vrot.lane.b32.xlu0 %v41, 15
  %v677 = vpop.permute.xlu0 %676
  %v678 = vsel %vm417, %v675, %v677
  %v679 = vsel %vm417, %v677, %v675
  %v680 = vmul.f32 %v679, %v423
  %v681 = vmul.f32 %v678, %v427
  %682 = vst [vmem:[#allocation2 + $0x20] sm:$0xff] %v680
  %683 = vst [vmem:[#allocation2 + $0x28] sm:$0xff] %v681
  %684 = vrot.lane.b32.xlu0 %v40, 1
  %v685 = vpop.permute.xlu0 %684
  %686 = vrot.lane.b32.xlu0 %v41, 1
  %v687 = vpop.permute.xlu0 %686
  %v688 = vsel %vm436, %v685, %v687
  %v689 = vsel %vm436, %v687, %v685
  %v690 = vmul.f32 %v689, %v442
  %v691 = vmul.f32 %v688, %v446
  %692 = vst [vmem:[#allocation2 + $0x30] sm:$0xff] %v690
  %693 = vst [vmem:[#allocation2 + $0x38] sm:$0xff] %v691
  %v694 = vmul.f32 %v40, %v454
  %v695 = vmul.f32 %v41, %v458
  %696 = vst [vmem:[#allocation2 + $0x40] sm:$0xff] %v694
  %697 = vst [vmem:[#allocation2 + $0x48] sm:$0xff] %v695
  %698 = vrot.lane.b32.xlu0 %v40, 127
  %v699 = vpop.permute.xlu0 %698
  %700 = vrot.lane.b32.xlu0 %v41, 127
  %v701 = vpop.permute.xlu0 %700
  %v702 = vsel %vm467, %v699, %v701
  %v703 = vsel %vm467, %v701, %v699
  %v704 = vmul.f32 %v702, %v473
  %v705 = vmul.f32 %v703, %v477
  %706 = vst [vmem:[#allocation2 + $0x50] sm:$0xff] %v704
  %707 = vst [vmem:[#allocation2 + $0x58] sm:$0xff] %v705
  %708 = vrot.lane.b32.xlu0 %v40, 113
  %v709 = vpop.permute.xlu0 %708
  %710 = vrot.lane.b32.xlu0 %v41, 113
  %v711 = vpop.permute.xlu0 %710
  %v712 = vsel %vm486, %v709, %v711
  %v713 = vsel %vm486, %v711, %v709
  %v714 = vmul.f32 %v712, %v492
  %v715 = vmul.f32 %v713, %v496
  %716 = vst [vmem:[#allocation2 + $0x60] sm:$0xff] %v714
  %717 = vst [vmem:[#allocation2 + $0x68] sm:$0xff] %v715
  %718 = vrot.lane.b32.xlu0 %v40, 112
  %v719 = vpop.permute.xlu0 %718
  %720 = vrot.lane.b32.xlu0 %v41, 112
  %v721 = vpop.permute.xlu0 %720
  %v722 = vsel %vm505, %v719, %v721
  %v723 = vsel %vm505, %v721, %v719
  %v724 = vmul.f32 %v722, %v511
  %v725 = vmul.f32 %v723, %v515
  %726 = vst [vmem:[#allocation2 + $0x70] sm:$0xff] %v724
  %727 = vst [vmem:[#allocation2 + $0x78] sm:$0xff] %v725
  %728 = vrot.lane.b32.xlu0 %v40, 111
  %v729 = vpop.permute.xlu0 %728
  %730 = vrot.lane.b32.xlu0 %v41, 111
  %v731 = vpop.permute.xlu0 %730
  %v732 = vsel %vm524, %v729, %v731
  %v733 = vsel %vm524, %v731, %v729
  %v734 = vmul.f32 %v732, %v530
  %v735 = vmul.f32 %v733, %v534
  %736 = vst [vmem:[#allocation2 + $0x80] sm:$0xff] %v734
  %737 = vst [vmem:[#allocation2 + $0x88] sm:$0xff] %v735
  %738 = vst [vmem:[#allocation2 + $0x90] sm:$0xff] %v38
  %739 = vst [vmem:[#allocation2 + $0x98] sm:$0xff] %v39
  %s740 = scalar_lea.vmem %s3, 8
  %v741 = vld [vmem:[%s740] sm:$0xff]
  %v742 = vld [vmem:[#allocation2] sm:$0xff]
  %v743 = vld [vmem:[#allocation2 + $0x8] sm:$0xff]
  %v744 = vld [vmem:[#allocation2 + $0x10] sm:$0xff]
  %v745 = vld [vmem:[#allocation2 + $0x18] sm:$0xff]
  %v746 = vld [vmem:[#allocation2 + $0x20] sm:$0xff]
  %v747 = vld [vmem:[#allocation2 + $0x28] sm:$0xff]
  %v748 = vld [vmem:[#allocation2 + $0x30] sm:$0xff]
  %v749 = vld [vmem:[#allocation2 + $0x38] sm:$0xff]
  %v750 = vld [vmem:[#allocation2 + $0x40] sm:$0xff]
  %v751 = vld [vmem:[#allocation2 + $0x48] sm:$0xff]
  %v752 = vld [vmem:[#allocation2 + $0x50] sm:$0xff]
  %v753 = vld [vmem:[#allocation2 + $0x58] sm:$0xff]
  %v754 = vld [vmem:[#allocation2 + $0x60] sm:$0xff]
  %v755 = vld [vmem:[#allocation2 + $0x68] sm:$0xff]
  %v756 = vld [vmem:[#allocation2 + $0x70] sm:$0xff]
  %v757 = vld [vmem:[#allocation2 + $0x78] sm:$0xff]
  %v758 = vld [vmem:[#allocation2 + $0x80] sm:$0xff]
  %v759 = vld [vmem:[#allocation2 + $0x88] sm:$0xff]
  %v760 = vld [vmem:[#allocation2 + $0x90] sm:$0xff]
  %v761 = vld [vmem:[#allocation2 + $0x98] sm:$0xff]
  %s762 = scalar_lea.vmem %s4, 8
  %v763 = vld [vmem:[%s762] sm:$0xff]
  %765 = vset.pattern.permute.xlu0 0
  %766 = vperm.xlu0 %765, %v763
  %v767 = vpop.permute.xlu0 %766
  %v770 = vsel %vm568, %v741, 0
  %772 = vmatprep.subr.mxu0 %v743
  %773 = vmatpush1.msra.mxu0 %v742
  %774 = vmatprep.subr.mxu0 %v745
  %775 = vmatpush1.msra.mxu0 %v744
  %776 = vmatprep.subr.mxu0 %v747
  %777 = vmatpush1.msra.mxu0 %v746
  %778 = vmatprep.subr.mxu0 %v749
  %779 = vmatpush1.msra.mxu0 %v748
  %780 = vmatprep.subr.mxu0 %v751
  %781 = vmatpush1.msra.mxu0 %v750
  %782 = vmatprep.subr.mxu0 %v753
  %783 = vmatpush1.msra.mxu0 %v752
  %784 = vmatprep.subr.mxu0 %v755
  %785 = vmatpush1.msra.mxu0 %v754
  %786 = vmatprep.subr.mxu0 %v757
  %787 = vmatpush1.msra.mxu0 %v756
  %788 = vmatprep.subr.mxu0 %v759
  %789 = vmatpush1.msra.mxu0 %v758
  %790 = vmatprep.subr.mxu0 %v761
  %791 = vmatpush1.msra.mxu0 %v760
  %792 = vmatprep.subr.mxu0 0.0
  %793 = vmatpush1.msra.mxu0 0.0
  %794 = vmatprep.subr.mxu0 0.0
  %795 = vmatpush1.msra.mxu0 0.0
  %796 = vmatprep.subr.mxu0 0.0
  %797 = vmatpush1.msra.mxu0 0.0
  %798 = vmatprep.subr.mxu0 0.0
  %799 = vmatpush1.msra.mxu0 0.0
  %800 = vmatprep.subr.mxu0 0.0
  %801 = vmatpush1.msra.mxu0 0.0
  %802 = vmatprep.subr.mxu0 0.0
  %803 = vmatpush1.msra.mxu0 0.0
  %804 = vmatprep.subr.mxu0 0.0
  %805 = vmatpush1.msra.mxu0 0.0
  %806 = vmatprep.subr.mxu0 0.0
  %807 = vmatpush1.msra.mxu0 0.0
  %808 = vmatprep.subr.mxu0 0.0
  %809 = vmatpush1.msra.mxu0 0.0
  %810 = vmatprep.subr.mxu0 0.0
  %811 = vmatpush1.msra.mxu0 0.0
  %812 = vmatprep.subr.mxu0 0.0
  %813 = vmatpush1.msra.mxu0 0.0
  %814 = vmatprep.subr.mxu0 0.0
  %815 = vmatpush1.msra.mxu0 0.0
  %816 = vmatprep.subr.mxu0 0.0
  %817 = vmatpush1.msra.mxu0 0.0
  %818 = vmatprep.subr.mxu0 0.0
  %819 = vmatpush1.msra.mxu0 0.0
  %820 = vmatprep.subr.mxu0 0.0
  %821 = vmatpush1.msra.mxu0 0.0
  %822 = vmatprep.subr.mxu0 0.0
  %823 = vmatpush1.msra.mxu0 0.0
  %824 = vmatprep.subr.mxu0 0.0
  %825 = vmatpush1.msra.mxu0 0.0
  %826 = vmatprep.subr.mxu0 0.0
  %827 = vmatpush1.msra.mxu0 0.0
  %828 = vmatprep.subr.mxu0 0.0
  %829 = vmatpush1.msra.mxu0 0.0
  %830 = vmatprep.subr.mxu0 0.0
  %831 = vmatpush1.msra.mxu0 0.0
  %832 = vmatprep.subr.mxu0 0.0
  %833 = vmatpush1.msra.mxu0 0.0
  %834 = vmatprep.subr.mxu0 0.0
  %835 = vmatpush1.msra.mxu0 0.0
  %836 = vmatprep.mubr.f32.mxu0 0.0
  %837 = vmatmul.mubr.f32.gmra.mrb[0].mxu0 %v770
  %v838 = vpop.f32.mrb[0].mxu0
  %v839 = vadd.f32 %v767, %v838
  %v840 = vpop.f32.mrb[0].mxu0
  %v841 = vadd.f32 %v767, %v840
  %842 = vdwg.mxu0
  %v843 = vadd.f32 %v40, %v839
  %v844 = vadd.f32 %v41, %v841
  %v845 = vmul.f32 %v843, %v648
  %v846 = vmul.f32 %v844, %v648
  %847 = vst [vmem:[%s10] sm:$0xff] %v845
  %848 = vst [vmem:[%s10 + $0x8] sm:$0xff] %v846
  %s849 = scalar_lea.vmem %s0, 16
  %v850 = vld [vmem:[%s849] sm:$0xff]
  %v851 = vld [vmem:[%s849 + $0x8] sm:$0xff]
  %s852 = scalar_lea.vmem %s1, 16
  %v853 = vld [vmem:[%s852] sm:$0xff]
  %v854 = vld [vmem:[%s852 + $0x8] sm:$0xff]
  %v855 = vadd.f32 %v850, %v851
  %856 = vadd.xlane.f32.xlu0 %v855
  %v857 = vpop.xlane.xlu0 %856
  %v858 = vmul.f32 %v857, %v45
  %v859 = vld [vmem:[%s5] sm:$0xf]
  %v860 = vld [vmem:[%s6] sm:$0xf]
  %v862 = vsel %vm49, %v859, 0
  %864 = vmatprep.subr.mxu0 0.0
  %865 = vmatpush1.msra.mxu0 %v858
  %866 = vmatprep.subr.mxu0 0.0
  %867 = vmatpush1.msra.mxu0 0.0
  %868 = vmatprep.subr.mxu0 0.0
  %869 = vmatpush1.msra.mxu0 0.0
  %870 = vmatprep.subr.mxu0 0.0
  %871 = vmatpush1.msra.mxu0 0.0
  %872 = vmatprep.subr.mxu0 0.0
  %873 = vmatpush1.msra.mxu0 0.0
  %874 = vmatprep.subr.mxu0 0.0
  %875 = vmatpush1.msra.mxu0 0.0
  %876 = vmatprep.subr.mxu0 0.0
  %877 = vmatpush1.msra.mxu0 0.0
  %878 = vmatprep.subr.mxu0 0.0
  %879 = vmatpush1.msra.mxu0 0.0
  %880 = vmatprep.subr.mxu0 0.0
  %881 = vmatpush1.msra.mxu0 0.0
  %882 = vmatprep.subr.mxu0 0.0
  %883 = vmatpush1.msra.mxu0 0.0
  %884 = vmatprep.subr.mxu0 0.0
  %885 = vmatpush1.msra.mxu0 0.0
  %886 = vmatprep.subr.mxu0 0.0
  %887 = vmatpush1.msra.mxu0 0.0
  %888 = vmatprep.subr.mxu0 0.0
  %889 = vmatpush1.msra.mxu0 0.0
  %890 = vmatprep.subr.mxu0 0.0
  %891 = vmatpush1.msra.mxu0 0.0
  %892 = vmatprep.subr.mxu0 0.0
  %893 = vmatpush1.msra.mxu0 0.0
  %894 = vmatprep.subr.mxu0 0.0
  %895 = vmatpush1.msra.mxu0 0.0
  %896 = vmatprep.subr.mxu0 0.0
  %897 = vmatpush1.msra.mxu0 0.0
  %898 = vmatprep.subr.mxu0 0.0
  %899 = vmatpush1.msra.mxu0 0.0
  %900 = vmatprep.subr.mxu0 0.0
  %901 = vmatpush1.msra.mxu0 0.0
  %902 = vmatprep.subr.mxu0 0.0
  %903 = vmatpush1.msra.mxu0 0.0
  %904 = vmatprep.subr.mxu0 0.0
  %905 = vmatpush1.msra.mxu0 0.0
  %906 = vmatprep.subr.mxu0 0.0
  %907 = vmatpush1.msra.mxu0 0.0
  %908 = vmatprep.subr.mxu0 0.0
  %909 = vmatpush1.msra.mxu0 0.0
  %910 = vmatprep.subr.mxu0 0.0
  %911 = vmatpush1.msra.mxu0 0.0
  %912 = vmatprep.subr.mxu0 0.0
  %913 = vmatpush1.msra.mxu0 0.0
  %914 = vmatprep.subr.mxu0 0.0
  %915 = vmatpush1.msra.mxu0 0.0
  %916 = vmatprep.subr.mxu0 0.0
  %917 = vmatpush1.msra.mxu0 0.0
  %918 = vmatprep.subr.mxu0 0.0
  %919 = vmatpush1.msra.mxu0 0.0
  %920 = vmatprep.subr.mxu0 0.0
  %921 = vmatpush1.msra.mxu0 0.0
  %922 = vmatprep.subr.mxu0 0.0
  %923 = vmatpush1.msra.mxu0 0.0
  %924 = vmatprep.subr.mxu0 0.0
  %925 = vmatpush1.msra.mxu0 0.0
  %926 = vmatprep.subr.mxu0 0.0
  %927 = vmatpush1.msra.mxu0 0.0
  %928 = vmatprep.mubr.f32.mxu0 0.0
  %929 = vmatmul.mubr.f32.gmra.mrb[0].mxu0 %v862
  %v930 = vpop.f32.mrb[0].mxu0
  %v931 = vadd.f32 %v860, %v930
  %v932 = vpop.f32.mrb[0].mxu0
  %933 = vdwg.mxu0
  %v934 = vmax.f32 %v931, 0.0
  %v935 = vld [vmem:[%s7] sm:$0xff]
  %v936 = vld [vmem:[%s8] sm:$0xff]
  %v938 = vsel %vm126, %v935, 0
  %v941 = vsel %vm130, %v934, 0
  %943 = vmatprep.subr.mxu0 0.0
  %944 = vmatpush1.msra.mxu0 %v941
  %945 = vmatprep.subr.mxu0 0.0
  %946 = vmatpush1.msra.mxu0 0.0
  %947 = vmatprep.subr.mxu0 0.0
  %948 = vmatpush1.msra.mxu0 0.0
  %949 = vmatprep.subr.mxu0 0.0
  %950 = vmatpush1.msra.mxu0 0.0
  %951 = vmatprep.subr.mxu0 0.0
  %952 = vmatpush1.msra.mxu0 0.0
  %953 = vmatprep.subr.mxu0 0.0
  %954 = vmatpush1.msra.mxu0 0.0
  %955 = vmatprep.subr.mxu0 0.0
  %956 = vmatpush1.msra.mxu0 0.0
  %957 = vmatprep.subr.mxu0 0.0
  %958 = vmatpush1.msra.mxu0 0.0
  %959 = vmatprep.subr.mxu0 0.0
  %960 = vmatpush1.msra.mxu0 0.0
  %961 = vmatprep.subr.mxu0 0.0
  %962 = vmatpush1.msra.mxu0 0.0
  %963 = vmatprep.subr.mxu0 0.0
  %964 = vmatpush1.msra.mxu0 0.0
  %965 = vmatprep.subr.mxu0 0.0
  %966 = vmatpush1.msra.mxu0 0.0
  %967 = vmatprep.subr.mxu0 0.0
  %968 = vmatpush1.msra.mxu0 0.0
  %969 = vmatprep.subr.mxu0 0.0
  %970 = vmatpush1.msra.mxu0 0.0
  %971 = vmatprep.subr.mxu0 0.0
  %972 = vmatpush1.msra.mxu0 0.0
  %973 = vmatprep.subr.mxu0 0.0
  %974 = vmatpush1.msra.mxu0 0.0
  %975 = vmatprep.subr.mxu0 0.0
  %976 = vmatpush1.msra.mxu0 0.0
  %977 = vmatprep.subr.mxu0 0.0
  %978 = vmatpush1.msra.mxu0 0.0
  %979 = vmatprep.subr.mxu0 0.0
  %980 = vmatpush1.msra.mxu0 0.0
  %981 = vmatprep.subr.mxu0 0.0
  %982 = vmatpush1.msra.mxu0 0.0
  %983 = vmatprep.subr.mxu0 0.0
  %984 = vmatpush1.msra.mxu0 0.0
  %985 = vmatprep.subr.mxu0 0.0
  %986 = vmatpush1.msra.mxu0 0.0
  %987 = vmatprep.subr.mxu0 0.0
  %988 = vmatpush1.msra.mxu0 0.0
  %989 = vmatprep.subr.mxu0 0.0
  %990 = vmatpush1.msra.mxu0 0.0
  %991 = vmatprep.subr.mxu0 0.0
  %992 = vmatpush1.msra.mxu0 0.0
  %993 = vmatprep.subr.mxu0 0.0
  %994 = vmatpush1.msra.mxu0 0.0
  %995 = vmatprep.subr.mxu0 0.0
  %996 = vmatpush1.msra.mxu0 0.0
  %997 = vmatprep.subr.mxu0 0.0
  %998 = vmatpush1.msra.mxu0 0.0
  %999 = vmatprep.subr.mxu0 0.0
  %1000 = vmatpush1.msra.mxu0 0.0
  %1001 = vmatprep.subr.mxu0 0.0
  %1002 = vmatpush1.msra.mxu0 0.0
  %1003 = vmatprep.subr.mxu0 0.0
  %1004 = vmatpush1.msra.mxu0 0.0
  %1005 = vmatprep.subr.mxu0 0.0
  %1006 = vmatpush1.msra.mxu0 0.0
  %1007 = vmatprep.mubr.f32.mxu0 0.0
  %1008 = vmatmul.mubr.f32.gmra.mrb[0].mxu0 %v938
  %v1009 = vpop.f32.mrb[0].mxu0
  %v1010 = vadd.f32 %v936, %v1009
  %v1011 = vpop.f32.mrb[0].mxu0
  %1012 = vdwg.mxu0
  %v1013 = vadd.f32 %v853, %v854
  %1014 = vadd.xlane.f32.xlu0 %v1013
  %v1015 = vpop.xlane.xlu0 %1014
  %v1016 = vmul.f32 %v1015, %v45
  %v1017 = vld [vmem:[%s208] sm:$0xf]
  %v1018 = vld [vmem:[%s210] sm:$0xf]
  %v1020 = vsel %vm49, %v1017, 0
  %1022 = vmatprep.subr.mxu0 0.0
  %1023 = vmatpush1.msra.mxu0 %v1016
  %1024 = vmatprep.subr.mxu0 0.0
  %1025 = vmatpush1.msra.mxu0 0.0
  %1026 = vmatprep.subr.mxu0 0.0
  %1027 = vmatpush1.msra.mxu0 0.0
  %1028 = vmatprep.subr.mxu0 0.0
  %1029 = vmatpush1.msra.mxu0 0.0
  %1030 = vmatprep.subr.mxu0 0.0
  %1031 = vmatpush1.msra.mxu0 0.0
  %1032 = vmatprep.subr.mxu0 0.0
  %1033 = vmatpush1.msra.mxu0 0.0
  %1034 = vmatprep.subr.mxu0 0.0
  %1035 = vmatpush1.msra.mxu0 0.0
  %1036 = vmatprep.subr.mxu0 0.0
  %1037 = vmatpush1.msra.mxu0 0.0
  %1038 = vmatprep.subr.mxu0 0.0
  %1039 = vmatpush1.msra.mxu0 0.0
  %1040 = vmatprep.subr.mxu0 0.0
  %1041 = vmatpush1.msra.mxu0 0.0
  %1042 = vmatprep.subr.mxu0 0.0
  %1043 = vmatpush1.msra.mxu0 0.0
  %1044 = vmatprep.subr.mxu0 0.0
  %1045 = vmatpush1.msra.mxu0 0.0
  %1046 = vmatprep.subr.mxu0 0.0
  %1047 = vmatpush1.msra.mxu0 0.0
  %1048 = vmatprep.subr.mxu0 0.0
  %1049 = vmatpush1.msra.mxu0 0.0
  %1050 = vmatprep.subr.mxu0 0.0
  %1051 = vmatpush1.msra.mxu0 0.0
  %1052 = vmatprep.subr.mxu0 0.0
  %1053 = vmatpush1.msra.mxu0 0.0
  %1054 = vmatprep.subr.mxu0 0.0
  %1055 = vmatpush1.msra.mxu0 0.0
  %1056 = vmatprep.subr.mxu0 0.0
  %1057 = vmatpush1.msra.mxu0 0.0
  %1058 = vmatprep.subr.mxu0 0.0
  %1059 = vmatpush1.msra.mxu0 0.0
  %1060 = vmatprep.subr.mxu0 0.0
  %1061 = vmatpush1.msra.mxu0 0.0
  %1062 = vmatprep.subr.mxu0 0.0
  %1063 = vmatpush1.msra.mxu0 0.0
  %1064 = vmatprep.subr.mxu0 0.0
  %1065 = vmatpush1.msra.mxu0 0.0
  %1066 = vmatprep.subr.mxu0 0.0
  %1067 = vmatpush1.msra.mxu0 0.0
  %1068 = vmatprep.subr.mxu0 0.0
  %1069 = vmatpush1.msra.mxu0 0.0
  %1070 = vmatprep.subr.mxu0 0.0
  %1071 = vmatpush1.msra.mxu0 0.0
  %1072 = vmatprep.subr.mxu0 0.0
  %1073 = vmatpush1.msra.mxu0 0.0
  %1074 = vmatprep.subr.mxu0 0.0
  %1075 = vmatpush1.msra.mxu0 0.0
  %1076 = vmatprep.subr.mxu0 0.0
  %1077 = vmatpush1.msra.mxu0 0.0
  %1078 = vmatprep.subr.mxu0 0.0
  %1079 = vmatpush1.msra.mxu0 0.0
  %1080 = vmatprep.subr.mxu0 0.0
  %1081 = vmatpush1.msra.mxu0 0.0
  %1082 = vmatprep.subr.mxu0 0.0
  %1083 = vmatpush1.msra.mxu0 0.0
  %1084 = vmatprep.subr.mxu0 0.0
  %1085 = vmatpush1.msra.mxu0 0.0
  %1086 = vmatprep.mubr.f32.mxu0 0.0
  %1087 = vmatmul.mubr.f32.gmra.mrb[0].mxu0 %v1020
  %v1088 = vpop.f32.mrb[0].mxu0
  %v1089 = vadd.f32 %v1018, %v1088
  %v1090 = vpop.f32.mrb[0].mxu0
  %1091 = vdwg.mxu0
  %v1092 = vmax.f32 %v1089, 0.0
  %v1093 = vld [vmem:[%s286] sm:$0xff]
  %v1094 = vld [vmem:[%s288] sm:$0xff]
  %v1096 = vsel %vm126, %v1093, 0
  %v1099 = vsel %vm130, %v1092, 0
  %1101 = vmatprep.subr.mxu0 0.0
  %1102 = vmatpush1.msra.mxu0 %v1099
  %1103 = vmatprep.subr.mxu0 0.0
  %1104 = vmatpush1.msra.mxu0 0.0
  %1105 = vmatprep.subr.mxu0 0.0
  %1106 = vmatpush1.msra.mxu0 0.0
  %1107 = vmatprep.subr.mxu0 0.0
  %1108 = vmatpush1.msra.mxu0 0.0
  %1109 = vmatprep.subr.mxu0 0.0
  %1110 = vmatpush1.msra.mxu0 0.0
  %1111 = vmatprep.subr.mxu0 0.0
  %1112 = vmatpush1.msra.mxu0 0.0
  %1113 = vmatprep.subr.mxu0 0.0
  %1114 = vmatpush1.msra.mxu0 0.0
  %1115 = vmatprep.subr.mxu0 0.0
  %1116 = vmatpush1.msra.mxu0 0.0
  %1117 = vmatprep.subr.mxu0 0.0
  %1118 = vmatpush1.msra.mxu0 0.0
  %1119 = vmatprep.subr.mxu0 0.0
  %1120 = vmatpush1.msra.mxu0 0.0
  %1121 = vmatprep.subr.mxu0 0.0
  %1122 = vmatpush1.msra.mxu0 0.0
  %1123 = vmatprep.subr.mxu0 0.0
  %1124 = vmatpush1.msra.mxu0 0.0
  %1125 = vmatprep.subr.mxu0 0.0
  %1126 = vmatpush1.msra.mxu0 0.0
  %1127 = vmatprep.subr.mxu0 0.0
  %1128 = vmatpush1.msra.mxu0 0.0
  %1129 = vmatprep.subr.mxu0 0.0
  %1130 = vmatpush1.msra.mxu0 0.0
  %1131 = vmatprep.subr.mxu0 0.0
  %1132 = vmatpush1.msra.mxu0 0.0
  %1133 = vmatprep.subr.mxu0 0.0
  %1134 = vmatpush1.msra.mxu0 0.0
  %1135 = vmatprep.subr.mxu0 0.0
  %1136 = vmatpush1.msra.mxu0 0.0
  %1137 = vmatprep.subr.mxu0 0.0
  %1138 = vmatpush1.msra.mxu0 0.0
  %1139 = vmatprep.subr.mxu0 0.0
  %1140 = vmatpush1.msra.mxu0 0.0
  %1141 = vmatprep.subr.mxu0 0.0
  %1142 = vmatpush1.msra.mxu0 0.0
  %1143 = vmatprep.subr.mxu0 0.0
  %1144 = vmatpush1.msra.mxu0 0.0
  %1145 = vmatprep.subr.mxu0 0.0
  %1146 = vmatpush1.msra.mxu0 0.0
  %1147 = vmatprep.subr.mxu0 0.0
  %1148 = vmatpush1.msra.mxu0 0.0
  %1149 = vmatprep.subr.mxu0 0.0
  %1150 = vmatpush1.msra.mxu0 0.0
  %1151 = vmatprep.subr.mxu0 0.0
  %1152 = vmatpush1.msra.mxu0 0.0
  %1153 = vmatprep.subr.mxu0 0.0
  %1154 = vmatpush1.msra.mxu0 0.0
  %1155 = vmatprep.subr.mxu0 0.0
  %1156 = vmatpush1.msra.mxu0 0.0
  %1157 = vmatprep.subr.mxu0 0.0
  %1158 = vmatpush1.msra.mxu0 0.0
  %1159 = vmatprep.subr.mxu0 0.0
  %1160 = vmatpush1.msra.mxu0 0.0
  %1161 = vmatprep.subr.mxu0 0.0
  %1162 = vmatpush1.msra.mxu0 0.0
  %1163 = vmatprep.subr.mxu0 0.0
  %1164 = vmatpush1.msra.mxu0 0.0
  %1165 = vmatprep.mubr.f32.mxu0 0.0
  %1166 = vmatmul.mubr.f32.gmra.mrb[0].mxu0 %v1096
  %v1167 = vpop.f32.mrb[0].mxu0
  %v1168 = vadd.f32 %v1094, %v1167
  %v1169 = vpop.f32.mrb[0].mxu0
  %1170 = vdwg.mxu0
  %v1171 = vadd.f32 %v1010, %v1168
  %v1172 = vxor.u32 %v1171, 2147483648
  %v1173 = vmul.f32 %v1172, 1.442695
  %v1174 = vpow.pop %v1173
  %v1175 = vadd.f32 %v1174, 1.0
  %v1176 = vrcp.pop %v1175
  %v1177 = vmul.f32 1.0, %v1176
  %1178 = vrot.lane.b32.xlu0 %v850, 17
  %v1179 = vpop.permute.xlu0 %1178
  %1180 = vrot.lane.b32.xlu0 %v851, 17
  %v1181 = vpop.permute.xlu0 %1180
  %v1182 = vsel %vm379, %v1179, %v1181
  %v1183 = vsel %vm379, %v1181, %v1179
  %v1184 = vmul.f32 %v1183, %v385
  %v1185 = vmul.f32 %v1182, %v389
  %1186 = vst [vmem:[#allocation2] sm:$0xff] %v1184
  %1187 = vst [vmem:[#allocation2 + $0x8] sm:$0xff] %v1185
  %1188 = vrot.lane.b32.xlu0 %v850, 16
  %v1189 = vpop.permute.xlu0 %1188
  %1190 = vrot.lane.b32.xlu0 %v851, 16
  %v1191 = vpop.permute.xlu0 %1190
  %v1192 = vsel %vm398, %v1189, %v1191
  %v1193 = vsel %vm398, %v1191, %v1189
  %v1194 = vmul.f32 %v1193, %v404
  %v1195 = vmul.f32 %v1192, %v408
  %1196 = vst [vmem:[#allocation2 + $0x10] sm:$0xff] %v1194
  %1197 = vst [vmem:[#allocation2 + $0x18] sm:$0xff] %v1195
  %1198 = vrot.lane.b32.xlu0 %v850, 15
  %v1199 = vpop.permute.xlu0 %1198
  %1200 = vrot.lane.b32.xlu0 %v851, 15
  %v1201 = vpop.permute.xlu0 %1200
  %v1202 = vsel %vm417, %v1199, %v1201
  %v1203 = vsel %vm417, %v1201, %v1199
  %v1204 = vmul.f32 %v1203, %v423
  %v1205 = vmul.f32 %v1202, %v427
  %1206 = vst [vmem:[#allocation2 + $0x20] sm:$0xff] %v1204
  %1207 = vst [vmem:[#allocation2 + $0x28] sm:$0xff] %v1205
  %1208 = vrot.lane.b32.xlu0 %v850, 1
  %v1209 = vpop.permute.xlu0 %1208
  %1210 = vrot.lane.b32.xlu0 %v851, 1
  %v1211 = vpop.permute.xlu0 %1210
  %v1212 = vsel %vm436, %v1209, %v1211
  %v1213 = vsel %vm436, %v1211, %v1209
  %v1214 = vmul.f32 %v1213, %v442
  %v1215 = vmul.f32 %v1212, %v446
  %1216 = vst [vmem:[#allocation2 + $0x30] sm:$0xff] %v1214
  %1217 = vst [vmem:[#allocation2 + $0x38] sm:$0xff] %v1215
  %v1218 = vmul.f32 %v850, %v454
  %v1219 = vmul.f32 %v851, %v458
  %1220 = vst [vmem:[#allocation2 + $0x40] sm:$0xff] %v1218
  %1221 = vst [vmem:[#allocation2 + $0x48] sm:$0xff] %v1219
  %1222 = vrot.lane.b32.xlu0 %v850, 127
  %v1223 = vpop.permute.xlu0 %1222
  %1224 = vrot.lane.b32.xlu0 %v851, 127
  %v1225 = vpop.permute.xlu0 %1224
  %v1226 = vsel %vm467, %v1223, %v1225
  %v1227 = vsel %vm467, %v1225, %v1223
  %v1228 = vmul.f32 %v1226, %v473
  %v1229 = vmul.f32 %v1227, %v477
  %1230 = vst [vmem:[#allocation2 + $0x50] sm:$0xff] %v1228
  %1231 = vst [vmem:[#allocation2 + $0x58] sm:$0xff] %v1229
  %1232 = vrot.lane.b32.xlu0 %v850, 113
  %v1233 = vpop.permute.xlu0 %1232
  %1234 = vrot.lane.b32.xlu0 %v851, 113
  %v1235 = vpop.permute.xlu0 %1234
  %v1236 = vsel %vm486, %v1233, %v1235
  %v1237 = vsel %vm486, %v1235, %v1233
  %v1238 = vmul.f32 %v1236, %v492
  %v1239 = vmul.f32 %v1237, %v496
  %1240 = vst [vmem:[#allocation2 + $0x60] sm:$0xff] %v1238
  %1241 = vst [vmem:[#allocation2 + $0x68] sm:$0xff] %v1239
  %1242 = vrot.lane.b32.xlu0 %v850, 112
  %v1243 = vpop.permute.xlu0 %1242
  %1244 = vrot.lane.b32.xlu0 %v851, 112
  %v1245 = vpop.permute.xlu0 %1244
  %v1246 = vsel %vm505, %v1243, %v1245
  %v1247 = vsel %vm505, %v1245, %v1243
  %v1248 = vmul.f32 %v1246, %v511
  %v1249 = vmul.f32 %v1247, %v515
  %1250 = vst [vmem:[#allocation2 + $0x70] sm:$0xff] %v1248
  %1251 = vst [vmem:[#allocation2 + $0x78] sm:$0xff] %v1249
  %1252 = vrot.lane.b32.xlu0 %v850, 111
  %v1253 = vpop.permute.xlu0 %1252
  %1254 = vrot.lane.b32.xlu0 %v851, 111
  %v1255 = vpop.permute.xlu0 %1254
  %v1256 = vsel %vm524, %v1253, %v1255
  %v1257 = vsel %vm524, %v1255, %v1253
  %v1258 = vmul.f32 %v1256, %v530
  %v1259 = vmul.f32 %v1257, %v534
  %1260 = vst [vmem:[#allocation2 + $0x80] sm:$0xff] %v1258
  %1261 = vst [vmem:[#allocation2 + $0x88] sm:$0xff] %v1259
  %1262 = vst [vmem:[#allocation2 + $0x90] sm:$0xff] %v853
  %1263 = vst [vmem:[#allocation2 + $0x98] sm:$0xff] %v854
  %v1264 = vld [vmem:[%s3] sm:$0xff]
  %v1265 = vld [vmem:[#allocation2] sm:$0xff]
  %v1266 = vld [vmem:[#allocation2 + $0x8] sm:$0xff]
  %v1267 = vld [vmem:[#allocation2 + $0x10] sm:$0xff]
  %v1268 = vld [vmem:[#allocation2 + $0x18] sm:$0xff]
  %v1269 = vld [vmem:[#allocation2 + $0x20] sm:$0xff]
  %v1270 = vld [vmem:[#allocation2 + $0x28] sm:$0xff]
  %v1271 = vld [vmem:[#allocation2 + $0x30] sm:$0xff]
  %v1272 = vld [vmem:[#allocation2 + $0x38] sm:$0xff]
  %v1273 = vld [vmem:[#allocation2 + $0x40] sm:$0xff]
  %v1274 = vld [vmem:[#allocation2 + $0x48] sm:$0xff]
  %v1275 = vld [vmem:[#allocation2 + $0x50] sm:$0xff]
  %v1276 = vld [vmem:[#allocation2 + $0x58] sm:$0xff]
  %v1277 = vld [vmem:[#allocation2 + $0x60] sm:$0xff]
  %v1278 = vld [vmem:[#allocation2 + $0x68] sm:$0xff]
  %v1279 = vld [vmem:[#allocation2 + $0x70] sm:$0xff]
  %v1280 = vld [vmem:[#allocation2 + $0x78] sm:$0xff]
  %v1281 = vld [vmem:[#allocation2 + $0x80] sm:$0xff]
  %v1282 = vld [vmem:[#allocation2 + $0x88] sm:$0xff]
  %v1283 = vld [vmem:[#allocation2 + $0x90] sm:$0xff]
  %v1284 = vld [vmem:[#allocation2 + $0x98] sm:$0xff]
  %v1285 = vld [vmem:[%s4] sm:$0xff]
  %1287 = vset.pattern.permute.xlu0 0
  %1288 = vperm.xlu0 %1287, %v1285
  %v1289 = vpop.permute.xlu0 %1288
  %v1292 = vsel %vm568, %v1264, 0
  %1294 = vmatprep.subr.mxu0 %v1266
  %1295 = vmatpush1.msra.mxu0 %v1265
  %1296 = vmatprep.subr.mxu0 %v1268
  %1297 = vmatpush1.msra.mxu0 %v1267
  %1298 = vmatprep.subr.mxu0 %v1270
  %1299 = vmatpush1.msra.mxu0 %v1269
  %1300 = vmatprep.subr.mxu0 %v1272
  %1301 = vmatpush1.msra.mxu0 %v1271
  %1302 = vmatprep.subr.mxu0 %v1274
  %1303 = vmatpush1.msra.mxu0 %v1273
  %1304 = vmatprep.subr.mxu0 %v1276
  %1305 = vmatpush1.msra.mxu0 %v1275
  %1306 = vmatprep.subr.mxu0 %v1278
  %1307 = vmatpush1.msra.mxu0 %v1277
  %1308 = vmatprep.subr.mxu0 %v1280
  %1309 = vmatpush1.msra.mxu0 %v1279
  %1310 = vmatprep.subr.mxu0 %v1282
  %1311 = vmatpush1.msra.mxu0 %v1281
  %1312 = vmatprep.subr.mxu0 %v1284
  %1313 = vmatpush1.msra.mxu0 %v1283
  %1314 = vmatprep.subr.mxu0 0.0
  %1315 = vmatpush1.msra.mxu0 0.0
  %1316 = vmatprep.subr.mxu0 0.0
  %1317 = vmatpush1.msra.mxu0 0.0
  %1318 = vmatprep.subr.mxu0 0.0
  %1319 = vmatpush1.msra.mxu0 0.0
  %1320 = vmatprep.subr.mxu0 0.0
  %1321 = vmatpush1.msra.mxu0 0.0
  %1322 = vmatprep.subr.mxu0 0.0
  %1323 = vmatpush1.msra.mxu0 0.0
  %1324 = vmatprep.subr.mxu0 0.0
  %1325 = vmatpush1.msra.mxu0 0.0
  %1326 = vmatprep.subr.mxu0 0.0
  %1327 = vmatpush1.msra.mxu0 0.0
  %1328 = vmatprep.subr.mxu0 0.0
  %1329 = vmatpush1.msra.mxu0 0.0
  %1330 = vmatprep.subr.mxu0 0.0
  %1331 = vmatpush1.msra.mxu0 0.0
  %1332 = vmatprep.subr.mxu0 0.0
  %1333 = vmatpush1.msra.mxu0 0.0
  %1334 = vmatprep.subr.mxu0 0.0
  %1335 = vmatpush1.msra.mxu0 0.0
  %1336 = vmatprep.subr.mxu0 0.0
  %1337 = vmatpush1.msra.mxu0 0.0
  %1338 = vmatprep.subr.mxu0 0.0
  %1339 = vmatpush1.msra.mxu0 0.0
  %1340 = vmatprep.subr.mxu0 0.0
  %1341 = vmatpush1.msra.mxu0 0.0
  %1342 = vmatprep.subr.mxu0 0.0
  %1343 = vmatpush1.msra.mxu0 0.0
  %1344 = vmatprep.subr.mxu0 0.0
  %1345 = vmatpush1.msra.mxu0 0.0
  %1346 = vmatprep.subr.mxu0 0.0
  %1347 = vmatpush1.msra.mxu0 0.0
  %1348 = vmatprep.subr.mxu0 0.0
  %1349 = vmatpush1.msra.mxu0 0.0
  %1350 = vmatprep.subr.mxu0 0.0
  %1351 = vmatpush1.msra.mxu0 0.0
  %1352 = vmatprep.subr.mxu0 0.0
  %1353 = vmatpush1.msra.mxu0 0.0
  %1354 = vmatprep.subr.mxu0 0.0
  %1355 = vmatpush1.msra.mxu0 0.0
  %1356 = vmatprep.subr.mxu0 0.0
  %1357 = vmatpush1.msra.mxu0 0.0
  %1358 = vmatprep.mubr.f32.mxu0 0.0
  %1359 = vmatmul.mubr.f32.gmra.mrb[0].mxu0 %v1292
  %v1360 = vpop.f32.mrb[0].mxu0
  %v1361 = vadd.f32 %v1289, %v1360
  %v1362 = vpop.f32.mrb[0].mxu0
  %v1363 = vadd.f32 %v1289, %v1362
  %1364 = vdwg.mxu0
  %v1365 = vadd.f32 %v850, %v1361
  %v1366 = vadd.f32 %v851, %v1363
  %1368 = vset.pattern.permute.xlu0 0
  %1369 = vperm.xlu0 %1368, %v1177
  %v1370 = vpop.permute.xlu0 %1369
  %v1372 = vmul.f32 %v1365, %v1370
  %v1373 = vmul.f32 %v1366, %v1370
  %s1374 = scalar_lea.vmem %s9, 16
  %1375 = vst [vmem:[%s1374] sm:$0xff] %v1372
  %1376 = vst [vmem:[%s1374 + $0x8] sm:$0xff] %v1373
  %1377 = vrot.lane.b32.xlu0 %v853, 17
  %v1378 = vpop.permute.xlu0 %1377
  %1379 = vrot.lane.b32.xlu0 %v854, 17
  %v1380 = vpop.permute.xlu0 %1379
  %v1381 = vsel %vm379, %v1378, %v1380
  %v1382 = vsel %vm379, %v1380, %v1378
  %v1383 = vmul.f32 %v1382, %v385
  %v1384 = vmul.f32 %v1381, %v389
  %1385 = vst [vmem:[#allocation2] sm:$0xff] %v1383
  %1386 = vst [vmem:[#allocation2 + $0x8] sm:$0xff] %v1384
  %1387 = vrot.lane.b32.xlu0 %v853, 16
  %v1388 = vpop.permute.xlu0 %1387
  %1389 = vrot.lane.b32.xlu0 %v854, 16
  %v1390 = vpop.permute.xlu0 %1389
  %v1391 = vsel %vm398, %v1388, %v1390
  %v1392 = vsel %vm398, %v1390, %v1388
  %v1393 = vmul.f32 %v1392, %v404
  %v1394 = vmul.f32 %v1391, %v408
  %1395 = vst [vmem:[#allocation2 + $0x10] sm:$0xff] %v1393
  %1396 = vst [vmem:[#allocation2 + $0x18] sm:$0xff] %v1394
  %1397 = vrot.lane.b32.xlu0 %v853, 15
  %v1398 = vpop.permute.xlu0 %1397
  %1399 = vrot.lane.b32.xlu0 %v854, 15
  %v1400 = vpop.permute.xlu0 %1399
  %v1401 = vsel %vm417, %v1398, %v1400
  %v1402 = vsel %vm417, %v1400, %v1398
  %v1403 = vmul.f32 %v1402, %v423
  %v1404 = vmul.f32 %v1401, %v427
  %1405 = vst [vmem:[#allocation2 + $0x20] sm:$0xff] %v1403
  %1406 = vst [vmem:[#allocation2 + $0x28] sm:$0xff] %v1404
  %1407 = vrot.lane.b32.xlu0 %v853, 1
  %v1408 = vpop.permute.xlu0 %1407
  %1409 = vrot.lane.b32.xlu0 %v854, 1
  %v1410 = vpop.permute.xlu0 %1409
  %v1411 = vsel %vm436, %v1408, %v1410
  %v1412 = vsel %vm436, %v1410, %v1408
  %v1413 = vmul.f32 %v1412, %v442
  %v1414 = vmul.f32 %v1411, %v446
  %1415 = vst [vmem:[#allocation2 + $0x30] sm:$0xff] %v1413
  %1416 = vst [vmem:[#allocation2 + $0x38] sm:$0xff] %v1414
  %v1417 = vmul.f32 %v853, %v454
  %v1418 = vmul.f32 %v854, %v458
  %1419 = vst [vmem:[#allocation2 + $0x40] sm:$0xff] %v1417
  %1420 = vst [vmem:[#allocation2 + $0x48] sm:$0xff] %v1418
  %1421 = vrot.lane.b32.xlu0 %v853, 127
  %v1422 = vpop.permute.xlu0 %1421
  %1423 = vrot.lane.b32.xlu0 %v854, 127
  %v1424 = vpop.permute.xlu0 %1423
  %v1425 = vsel %vm467, %v1422, %v1424
  %v1426 = vsel %vm467, %v1424, %v1422
  %v1427 = vmul.f32 %v1425, %v473
  %v1428 = vmul.f32 %v1426, %v477
  %1429 = vst [vmem:[#allocation2 + $0x50] sm:$0xff] %v1427
  %1430 = vst [vmem:[#allocation2 + $0x58] sm:$0xff] %v1428
  %1431 = vrot.lane.b32.xlu0 %v853, 113
  %v1432 = vpop.permute.xlu0 %1431
  %1433 = vrot.lane.b32.xlu0 %v854, 113
  %v1434 = vpop.permute.xlu0 %1433
  %v1435 = vsel %vm486, %v1432, %v1434
  %v1436 = vsel %vm486, %v1434, %v1432
  %v1437 = vmul.f32 %v1435, %v492
  %v1438 = vmul.f32 %v1436, %v496
  %1439 = vst [vmem:[#allocation2 + $0x60] sm:$0xff] %v1437
  %1440 = vst [vmem:[#allocation2 + $0x68] sm:$0xff] %v1438
  %1441 = vrot.lane.b32.xlu0 %v853, 112
  %v1442 = vpop.permute.xlu0 %1441
  %1443 = vrot.lane.b32.xlu0 %v854, 112
  %v1444 = vpop.permute.xlu0 %1443
  %v1445 = vsel %vm505, %v1442, %v1444
  %v1446 = vsel %vm505, %v1444, %v1442
  %v1447 = vmul.f32 %v1445, %v511
  %v1448 = vmul.f32 %v1446, %v515
  %1449 = vst [vmem:[#allocation2 + $0x70] sm:$0xff] %v1447
  %1450 = vst [vmem:[#allocation2 + $0x78] sm:$0xff] %v1448
  %1451 = vrot.lane.b32.xlu0 %v853, 111
  %v1452 = vpop.permute.xlu0 %1451
  %1453 = vrot.lane.b32.xlu0 %v854, 111
  %v1454 = vpop.permute.xlu0 %1453
  %v1455 = vsel %vm524, %v1452, %v1454
  %v1456 = vsel %vm524, %v1454, %v1452
  %v1457 = vmul.f32 %v1455, %v530
  %v1458 = vmul.f32 %v1456, %v534
  %1459 = vst [vmem:[#allocation2 + $0x80] sm:$0xff] %v1457
  %1460 = vst [vmem:[#allocation2 + $0x88] sm:$0xff] %v1458
  %1461 = vst [vmem:[#allocation2 + $0x90] sm:$0xff] %v850
  %1462 = vst [vmem:[#allocation2 + $0x98] sm:$0xff] %v851
  %v1463 = vld [vmem:[%s740] sm:$0xff]
  %v1464 = vld [vmem:[#allocation2] sm:$0xff]
  %v1465 = vld [vmem:[#allocation2 + $0x8] sm:$0xff]
  %v1466 = vld [vmem:[#allocation2 + $0x10] sm:$0xff]
  %v1467 = vld [vmem:[#allocation2 + $0x18] sm:$0xff]
  %v1468 = vld [vmem:[#allocation2 + $0x20] sm:$0xff]
  %v1469 = vld [vmem:[#allocation2 + $0x28] sm:$0xff]
  %v1470 = vld [vmem:[#allocation2 + $0x30] sm:$0xff]
  %v1471 = vld [vmem:[#allocation2 + $0x38] sm:$0xff]
  %v1472 = vld [vmem:[#allocation2 + $0x40] sm:$0xff]
  %v1473 = vld [vmem:[#allocation2 + $0x48] sm:$0xff]
  %v1474 = vld [vmem:[#allocation2 + $0x50] sm:$0xff]
  %v1475 = vld [vmem:[#allocation2 + $0x58] sm:$0xff]
  %v1476 = vld [vmem:[#allocation2 + $0x60] sm:$0xff]
  %v1477 = vld [vmem:[#allocation2 + $0x68] sm:$0xff]
  %v1478 = vld [vmem:[#allocation2 + $0x70] sm:$0xff]
  %v1479 = vld [vmem:[#allocation2 + $0x78] sm:$0xff]
  %v1480 = vld [vmem:[#allocation2 + $0x80] sm:$0xff]
  %v1481 = vld [vmem:[#allocation2 + $0x88] sm:$0xff]
  %v1482 = vld [vmem:[#allocation2 + $0x90] sm:$0xff]
  %v1483 = vld [vmem:[#allocation2 + $0x98] sm:$0xff]
  %v1484 = vld [vmem:[%s762] sm:$0xff]
  %1486 = vset.pattern.permute.xlu0 0
  %1487 = vperm.xlu0 %1486, %v1484
  %v1488 = vpop.permute.xlu0 %1487
  %v1491 = vsel %vm568, %v1463, 0
  %1493 = vmatprep.subr.mxu0 %v1465
  %1494 = vmatpush1.msra.mxu0 %v1464
  %1495 = vmatprep.subr.mxu0 %v1467
  %1496 = vmatpush1.msra.mxu0 %v1466
  %1497 = vmatprep.subr.mxu0 %v1469
  %1498 = vmatpush1.msra.mxu0 %v1468
  %1499 = vmatprep.subr.mxu0 %v1471
  %1500 = vmatpush1.msra.mxu0 %v1470
  %1501 = vmatprep.subr.mxu0 %v1473
  %1502 = vmatpush1.msra.mxu0 %v1472
  %1503 = vmatprep.subr.mxu0 %v1475
  %1504 = vmatpush1.msra.mxu0 %v1474
  %1505 = vmatprep.subr.mxu0 %v1477
  %1506 = vmatpush1.msra.mxu0 %v1476
  %1507 = vmatprep.subr.mxu0 %v1479
  %1508 = vmatpush1.msra.mxu0 %v1478
  %1509 = vmatprep.subr.mxu0 %v1481
  %1510 = vmatpush1.msra.mxu0 %v1480
  %1511 = vmatprep.subr.mxu0 %v1483
  %1512 = vmatpush1.msra.mxu0 %v1482
  %1513 = vmatprep.subr.mxu0 0.0
  %1514 = vmatpush1.msra.mxu0 0.0
  %1515 = vmatprep.subr.mxu0 0.0
  %1516 = vmatpush1.msra.mxu0 0.0
  %1517 = vmatprep.subr.mxu0 0.0
  %1518 = vmatpush1.msra.mxu0 0.0
  %1519 = vmatprep.subr.mxu0 0.0
  %1520 = vmatpush1.msra.mxu0 0.0
  %1521 = vmatprep.subr.mxu0 0.0
  %1522 = vmatpush1.msra.mxu0 0.0
  %1523 = vmatprep.subr.mxu0 0.0
  %1524 = vmatpush1.msra.mxu0 0.0
  %1525 = vmatprep.subr.mxu0 0.0
  %1526 = vmatpush1.msra.mxu0 0.0
  %1527 = vmatprep.subr.mxu0 0.0
  %1528 = vmatpush1.msra.mxu0 0.0
  %1529 = vmatprep.subr.mxu0 0.0
  %1530 = vmatpush1.msra.mxu0 0.0
  %1531 = vmatprep.subr.mxu0 0.0
  %1532 = vmatpush1.msra.mxu0 0.0
  %1533 = vmatprep.subr.mxu0 0.0
  %1534 = vmatpush1.msra.mxu0 0.0
  %1535 = vmatprep.subr.mxu0 0.0
  %1536 = vmatpush1.msra.mxu0 0.0
  %1537 = vmatprep.subr.mxu0 0.0
  %1538 = vmatpush1.msra.mxu0 0.0
  %1539 = vmatprep.subr.mxu0 0.0
  %1540 = vmatpush1.msra.mxu0 0.0
  %1541 = vmatprep.subr.mxu0 0.0
  %1542 = vmatpush1.msra.mxu0 0.0
  %1543 = vmatprep.subr.mxu0 0.0
  %1544 = vmatpush1.msra.mxu0 0.0
  %1545 = vmatprep.subr.mxu0 0.0
  %1546 = vmatpush1.msra.mxu0 0.0
  %1547 = vmatprep.subr.mxu0 0.0
  %1548 = vmatpush1.msra.mxu0 0.0
  %1549 = vmatprep.subr.mxu0 0.0
  %1550 = vmatpush1.msra.mxu0 0.0
  %1551 = vmatprep.subr.mxu0 0.0
  %1552 = vmatpush1.msra.mxu0 0.0
  %1553 = vmatprep.subr.mxu0 0.0
  %1554 = vmatpush1.msra.mxu0 0.0
  %1555 = vmatprep.subr.mxu0 0.0
  %1556 = vmatpush1.msra.mxu0 0.0
  %1557 = vmatprep.mubr.f32.mxu0 0.0
  %1558 = vmatmul.mubr.f32.gmra.mrb[0].mxu0 %v1491
  %v1559 = vpop.f32.mrb[0].mxu0
  %v1560 = vadd.f32 %v1488, %v1559
  %v1561 = vpop.f32.mrb[0].mxu0
  %v1562 = vadd.f32 %v1488, %v1561
  %1563 = vdwg.mxu0
  %v1564 = vadd.f32 %v853, %v1560
  %v1565 = vadd.f32 %v854, %v1562
  %v1566 = vmul.f32 %v1564, %v1370
  %v1567 = vmul.f32 %v1565, %v1370
  %s1568 = scalar_lea.vmem %s10, 16
  %1569 = vst [vmem:[%s1568] sm:$0xff] %v1566
  %1570 = vst [vmem:[%s1568 + $0x8] sm:$0xff] %v1567
  // Predicated region
  $region38: #{cas_forward.1} parent=0 // pred_check
    _
  $region39: #{cas_forward.1} parent=0 // pred_check_branch
    %1572 = sbr.rel (0) target = $region41
  $region40: #{cas_forward.1} parent=0 // pred_region
    _
  $region41: #{cas_forward.1} parent=0 // pred_fallthru
    _
  // Predicated region
  $region42: #{cas_forward.1} parent=0 // pred_check
    _
  $region43: #{cas_forward.1} parent=0 // pred_check_branch
    %1574 = sbr.rel (0) target = $region45
  $region44: #{cas_forward.1} parent=0 // pred_region
    _
  $region45: #{cas_forward.1} parent=0 // pred_fallthru
    _
  // Predicated region
  $region46: #{cas_forward.1} parent=0 // pred_check
    _
  $region47: #{cas_forward.1} parent=0 // pred_check_branch
    %1576 = sbr.rel (0) target = $region49
  $region48: #{cas_forward.1} parent=0 // pred_region
    _
  $region49: #{cas_forward.1} parent=0 // pred_fallthru
    _
  // Predicated region
  $region50: #{cas_forward.1} parent=0 // pred_check
    _
  $region51: #{cas_forward.1} parent=0 // pred_check_branch
    %1578 = sbr.rel (0) target = $region53
  $region52: #{cas_forward.1} parent=0 // pred_region
    _
  $region53: #{cas_forward.1} parent=0 // pred_fallthru
    _

</llo_original>
